<compile_context>
chip_gen: v6e
topology: v6e:2x2x1
jax: 0.10.0
libtpu: 0.0.40
codegen_flags: <defaults>
</compile_context>

<pallas_src>
import jax
import jax.numpy as jnp
import numpy as np
from jax.experimental import pallas as pl
from jax.experimental.pallas import tpu as pltpu

# ----- logical sizes (from the PyTorch module) -----
N_NODES = 16
N_FEATURES = 20
N_HIDDEN = 16
N_CLASSES = 2
BATCH = 16                 # 16 independent graphs fused into one kernel invocation
BN = BATCH * N_NODES       # 256 stacked node rows -> full MXU row occupancy

# ----- padded sizes -----
F_PAD = 32                 # feature dim pad (20 -> 32; block == full dim, so legal)
H_PAD = 128                # hidden dim pad (lane-aligned)
C_PAD = 128                # class dim pad -> lane-dense output store

# ----- weight slab (bf16): rows [0,32)=W1, rows [32,160)=W2 -----
W1_OFF = 0
W2_OFF = F_PAD
W_ROWS = F_PAD + H_PAD     # 160

# ----- bias slab (f32): row 0 = b1, row 8 = b2 (padded class cols = -1e30) -----
B1_ROW = 0
B2_ROW = 8
B_ROWS = 16

NEG = -1e30                # masks padded class columns out of the softmax (f32 only)


def gcn_kernel(a_ref, x_ref, w_ref, b_ref, out_ref):
    a = a_ref[...]                                   # [BN, BN]    bf16 block-diag A_hat
    x = x_ref[...]                                   # [BN, F_PAD] bf16

    w1 = w_ref[pl.ds(W1_OFF, F_PAD), :]              # [F_PAD, H_PAD] bf16
    w2 = w_ref[pl.ds(W2_OFF, H_PAD), :]              # [H_PAD, C_PAD] bf16
    b1 = b_ref[pl.ds(B1_ROW, 1), :]                  # [1, H_PAD] f32
    b2 = b_ref[pl.ds(B2_ROW, 1), :]                  # [1, C_PAD] f32 (pad cols = -1e30)

    # ----- GCNConv layer 1: A_hat @ (X @ W1) + b1, then ReLU (f32 accum) -----
    h = jnp.dot(x, w1, preferred_element_type=jnp.float32)                     # [BN, H_PAD]
    h = jnp.dot(a, h.astype(jnp.bfloat16), preferred_element_type=jnp.float32) + b1
    h = jnp.maximum(h, 0.0)

    # F.dropout(h, training=self.training): identity in eval mode (training=False)

    # ----- GCNConv layer 2: A_hat @ (H @ W2) + b2 -----
    o = jnp.dot(h.astype(jnp.bfloat16), w2, preferred_element_type=jnp.float32)  # [BN, C_PAD]
    o = jnp.dot(a, o.astype(jnp.bfloat16), preferred_element_type=jnp.float32) + b2

    # ----- log_softmax over classes (padded columns: exp(-1e30) == 0) -----
    m = jnp.max(o, axis=1, keepdims=True)
    z = o - m
    lse = jnp.log(jnp.sum(jnp.exp(z), axis=1, keepdims=True))
    out_ref[...] = z - lse                           # lane-dense [BN, 128] store


@jax.jit
def gcn_forward(a_bd, x_flat, w_slab, b_slab):
    """a_bd: [BN,BN] bf16, x_flat: [BN,F_PAD] bf16, w_slab: [160,128] bf16, b_slab: [16,128] f32."""
    out = pl.pallas_call(
        gcn_kernel,
        out_shape=jax.ShapeDtypeStruct((BN, C_PAD), jnp.float32),
        grid_spec=pltpu.PrefetchScalarGridSpec(
            num_scalar_prefetch=0,
            grid=(1,),                               # single step: whole fused batch
            in_specs=[
                pl.BlockSpec((BN, BN), lambda i: (0, 0)),        # block-diag A_hat
                pl.BlockSpec((BN, F_PAD), lambda i: (0, 0)),     # stacked features
                pl.BlockSpec((W_ROWS, H_PAD), lambda i: (0, 0)), # bf16 weight slab
                pl.BlockSpec((B_ROWS, C_PAD), lambda i: (0, 0)), # f32 bias/mask slab
            ],
            out_specs=pl.BlockSpec((BN, C_PAD), lambda i: (0, 0)),
        ),
        compiler_params=pltpu.CompilerParams(
            dimension_semantics=("arbitrary",)),     # nothing to shard at grid=(1,)
    )(a_bd, x_flat, w_slab, b_slab)
    return out.reshape(BATCH, N_NODES, C_PAD)[:, :, :N_CLASSES]   # drop lane padding


# ---------------- host-side preprocessing (pure JAX, not in the kernel) ----------------

def build_normalized_adjacency(edge_index, num_nodes):
    """PyG gcn_norm with default (all-ones) edge weights:
       duplicate OFF-diagonal edges accumulate; add_remaining_self_loops leaves every
       node with exactly one self-loop of weight 1.0 (existing self-loops are replaced,
       not summed, and missing ones are filled with 1.0); deg = incoming-edge row sums;
       A_hat = D^{-1/2} A D^{-1/2}."""
    src, dst = edge_index[0], edge_index[1]
    off_diag = (src != dst).astype(jnp.float32)
    a = jnp.zeros((num_nodes, num_nodes), jnp.float32)
    a = a.at[dst, src].add(off_diag)                 # off-diagonal duplicates accumulate
    idx = jnp.arange(num_nodes)
    a = a.at[idx, idx].set(1.0)                      # self-loop weight = 1.0 for all nodes
    deg = jnp.sum(a, axis=1)
    d_inv_sqrt = jnp.where(deg > 0, 1.0 / jnp.sqrt(deg), 0.0)
    return d_inv_sqrt[:, None] * a * d_inv_sqrt[None, :]


def block_diag_batch(a_batch):
    """[B, N, N] per-graph A_hat -> [B*N, B*N] block-diagonal A_hat."""
    B, N, _ = a_batch.shape
    eye = jnp.eye(B, dtype=a_batch.dtype)
    return jnp.einsum('bnm,bc->bncm', a_batch, eye).reshape(B * N, B * N)


def glorot(key, fan_in, fan_out):
    limit = jnp.sqrt(6.0 / (fan_in + fan_out))
    return jax.random.uniform(key, (fan_in, fan_out), jnp.float32, -limit, limit)


def pack_weights(w1, w2):
    """Pad W1/W2 and stack into one lane-aligned bf16 slab [W_ROWS, 128]."""
    w1p = jnp.zeros((F_PAD, H_PAD), jnp.float32).at[:N_FEATURES, :N_HIDDEN].set(w1)
    w2p = jnp.zeros((H_PAD, C_PAD), jnp.float32).at[:N_HIDDEN, :N_CLASSES].set(w2)
    return jnp.concatenate([w1p, w2p], axis=0).astype(jnp.bfloat16)


def pack_biases(b1, b2):
    """f32 bias slab [B_ROWS, 128]; padded class columns of b2 carry -1e30 (softmax mask)."""
    b = jnp.zeros((B_ROWS, C_PAD), jnp.float32)
    b = b.at[B1_ROW, :N_HIDDEN].set(b1)
    b2_row = jnp.full((C_PAD,), NEG, jnp.float32).at[:N_CLASSES].set(b2)
    b = b.at[B2_ROW].set(b2_row)
    return b


# ---------------- references ----------------

def reference_forward_f32(a_hat, x, w1, b1, w2, b2):
    h = jnp.maximum(a_hat @ (x @ w1) + b1, 0.0)
    o = a_hat @ (h @ w2) + b2
    return jax.nn.log_softmax(o, axis=-1)


def reference_forward_bf16(a_hat, x, w1, b1, w2, b2):
    """Same forward with the kernel's exact casting (bf16 MXU inputs, f32 accumulate)."""
    bf, f32 = jnp.bfloat16, jnp.float32
    a = a_hat.astype(bf)
    h = jnp.dot(x.astype(bf), w1.astype(bf), preferred_element_type=f32)
    h = jnp.dot(a, h.astype(bf), preferred_element_type=f32) + b1
    h = jnp.maximum(h, 0.0)
    o = jnp.dot(h.astype(bf), w2.astype(bf), preferred_element_type=f32)
    o = jnp.dot(a, o.astype(bf), preferred_element_type=f32) + b2
    return jax.nn.log_softmax(o, axis=-1)


if __name__ == "__main__":
    key = jax.random.PRNGKey(0)
    k_w1, k_w2, k_graphs = jax.random.split(key, 3)
    graph_keys = jax.random.split(k_graphs, BATCH)

    # Deterministic synthetic batch of graphs: node features + random edges per graph.
    xs, a_hats = [], []
    for gk in graph_keys:
        k_x, k_e = jax.random.split(gk)
        xs.append(jax.random.normal(k_x, (N_NODES, N_FEATURES), jnp.float32))
        edge_index = jax.random.randint(k_e, (2, 48), 0, N_NODES, jnp.int32)
        a_hats.append(build_normalized_adjacency(edge_index, N_NODES))
    x_batch = jnp.stack(xs)                                   # [B, N, F]
    a_batch = jnp.stack(a_hats)                               # [B, N, N]

    # Deterministic parameter init (GCNConv: glorot weight, zero bias).
    w1 = glorot(k_w1, N_FEATURES, N_HIDDEN)
    b1 = jnp.zeros((N_HIDDEN,), jnp.float32)
    w2 = glorot(k_w2, N_HIDDEN, N_CLASSES)
    b2 = jnp.zeros((N_CLASSES,), jnp.float32)

    # Host-side fusion: one block-diagonal A_hat, one stacked/padded node-feature matrix.
    a_bd = block_diag_batch(a_batch).astype(jnp.bfloat16)     # [BN, BN]
    x_flat = (jnp.zeros((BN, F_PAD), jnp.float32)
              .at[:, :N_FEATURES].set(x_batch.reshape(BN, N_FEATURES))
              .astype(jnp.bfloat16))                          # [BN, F_PAD]
    w_slab = pack_weights(w1, w2)                             # [160, 128] bf16
    b_slab = pack_biases(b1, b2)                              # [16, 128]  f32

    out = gcn_forward(a_bd, x_flat, w_slab, b_slab)
    out = jax.block_until_ready(out)
    assert out.shape == (BATCH, N_NODES, N_CLASSES)

    # Sanity 1: log_softmax rows exponentiate-and-sum to 1.
    row_sums = jnp.sum(jnp.exp(out), axis=-1)
    assert bool(jnp.all(jnp.abs(row_sums - 1.0) < 1e-3))

    # Sanity 2: matches a pure-JAX reference using the kernel's exact bf16/f32 casting.
    ref_bf16 = jax.vmap(lambda a, x: reference_forward_bf16(a, x, w1, b1, w2, b2))(
        a_batch, x_batch)
    assert np.allclose(np.asarray(out), np.asarray(ref_bf16), atol=1e-4, rtol=1e-3)

    # Sanity 3: coarse check against the full-f32 semantics (bf16 MXU inputs => loose tol).
    ref_f32 = jax.vmap(lambda a, x: reference_forward_f32(a, x, w1, b1, w2, b2))(
        a_batch, x_batch)
    assert np.allclose(np.asarray(out), np.asarray(ref_f32), atol=0.2, rtol=0.2)

    print("KERNEL_OK")
</pallas_src>

<mosaic_0001>
module attributes {stable_mosaic.version = 11 : i64} {
  func.func @gcn_kernel(%arg0: i32, %arg1: memref<256x256xbf16, #tpu.memory_space<vmem>>, %arg2: memref<256x32xbf16, #tpu.memory_space<vmem>>, %arg3: memref<160x128xbf16, #tpu.memory_space<vmem>>, %arg4: memref<16x128xf32, #tpu.memory_space<vmem>>, %arg5: memref<256x128xf32, #tpu.memory_space<vmem>>) attributes {dimension_semantics = [#tpu.dimension_semantics<arbitrary>], iteration_bounds = array<i64: 1>, scalar_prefetch = 0 : i64, scratch_operands = 0 : i64, tpu.core_type = #tpu.core_type<tc>, window_params = [{pipeline_mode = #tpu.pipeline_mode<synchronous>, transform_indices = @transform_0, window_bounds = array<i64: 256, 256>}, {pipeline_mode = #tpu.pipeline_mode<synchronous>, transform_indices = @transform_1, window_bounds = array<i64: 256, 32>}, {pipeline_mode = #tpu.pipeline_mode<synchronous>, transform_indices = @transform_2, window_bounds = array<i64: 160, 128>}, {pipeline_mode = #tpu.pipeline_mode<synchronous>, transform_indices = @transform_3, window_bounds = array<i64: 16, 128>}, {pipeline_mode = #tpu.pipeline_mode<synchronous>, transform_indices = @transform_4, window_bounds = array<i64: 256, 128>}]} {
    %c0 = arith.constant 0 : index
    %c0_0 = arith.constant 0 : index
    %0 = vector.load %arg1[%c0, %c0_0] : memref<256x256xbf16, #tpu.memory_space<vmem>>, vector<256x256xbf16>
    %c0_1 = arith.constant 0 : index
    %c0_2 = arith.constant 0 : index
    %1 = vector.load %arg2[%c0_1, %c0_2] : memref<256x32xbf16, #tpu.memory_space<vmem>>, vector<256x32xbf16>
    %c0_3 = arith.constant 0 : index
    %c0_4 = arith.constant 0 : index
    %2 = vector.load %arg3[%c0_3, %c0_4] : memref<160x128xbf16, #tpu.memory_space<vmem>>, vector<32x128xbf16>
    %c32 = arith.constant 32 : index
    %c0_5 = arith.constant 0 : index
    %3 = vector.load %arg3[%c32, %c0_5] : memref<160x128xbf16, #tpu.memory_space<vmem>>, vector<128x128xbf16>
    %c0_6 = arith.constant 0 : index
    %c0_7 = arith.constant 0 : index
    %4 = vector.load %arg4[%c0_6, %c0_7] : memref<16x128xf32, #tpu.memory_space<vmem>>, vector<1x128xf32>
    %c8 = arith.constant 8 : index
    %c0_8 = arith.constant 0 : index
    %5 = vector.load %arg4[%c8, %c0_8] : memref<16x128xf32, #tpu.memory_space<vmem>>, vector<1x128xf32>
    %cst = arith.constant dense<0.000000e+00> : vector<256x128xf32>
    %6 = tpu.matmul %1, %2, %cst {dimension_numbers = #tpu.dot_dimension_numbers<[1], [0], [0], [1], [0, 0, 1, 1], [], []>} : vector<256x32xbf16>, vector<32x128xbf16>, vector<256x128xf32> -> vector<256x128xf32>
    %7 = arith.truncf %6 : vector<256x128xf32> to vector<256x128xbf16>
    %cst_9 = arith.constant dense<0.000000e+00> : vector<256x128xf32>
    %8 = tpu.matmul %0, %7, %cst_9 {dimension_numbers = #tpu.dot_dimension_numbers<[1], [0], [0], [1], [0, 0, 1, 1], [], []>} : vector<256x256xbf16>, vector<256x128xbf16>, vector<256x128xf32> -> vector<256x128xf32>
    %9 = vector.broadcast %4 : vector<1x128xf32> to vector<256x128xf32>
    %10 = arith.addf %8, %9 : vector<256x128xf32>
    %cst_10 = arith.constant 0.000000e+00 : f32
    %11 = vector.broadcast %cst_10 : f32 to vector<256x128xf32>
    %12 = arith.maximumf %10, %11 : vector<256x128xf32>
    %13 = arith.truncf %12 : vector<256x128xf32> to vector<256x128xbf16>
    %cst_11 = arith.constant dense<0.000000e+00> : vector<256x128xf32>
    %14 = tpu.matmul %13, %3, %cst_11 {dimension_numbers = #tpu.dot_dimension_numbers<[1], [0], [0], [1], [0, 0, 1, 1], [], []>} : vector<256x128xbf16>, vector<128x128xbf16>, vector<256x128xf32> -> vector<256x128xf32>
    %15 = arith.truncf %14 : vector<256x128xf32> to vector<256x128xbf16>
    %cst_12 = arith.constant dense<0.000000e+00> : vector<256x128xf32>
    %16 = tpu.matmul %0, %15, %cst_12 {dimension_numbers = #tpu.dot_dimension_numbers<[1], [0], [0], [1], [0, 0, 1, 1], [], []>} : vector<256x256xbf16>, vector<256x128xbf16>, vector<256x128xf32> -> vector<256x128xf32>
    %17 = vector.broadcast %5 : vector<1x128xf32> to vector<256x128xf32>
    %18 = arith.addf %16, %17 : vector<256x128xf32>
    %cst_13 = arith.constant dense<0xFF800000> : vector<256xf32>
    %19 = vector.multi_reduction <maximumf>, %18, %cst_13 [1] : vector<256x128xf32> to vector<256xf32>
    %20 = vector.shape_cast %19 : vector<256xf32> to vector<256x1xf32>
    %21 = vector.broadcast %20 : vector<256x1xf32> to vector<256x128xf32>
    %22 = arith.subf %18, %21 : vector<256x128xf32>
    %23 = math.exp %22 : vector<256x128xf32>
    %cst_14 = arith.constant dense<0.000000e+00> : vector<256xf32>
    %24 = vector.multi_reduction <add>, %23, %cst_14 [1] : vector<256x128xf32> to vector<256xf32>
    %25 = vector.shape_cast %24 : vector<256xf32> to vector<256x1xf32>
    %26 = math.log %25 : vector<256x1xf32>
    %27 = vector.broadcast %26 : vector<256x1xf32> to vector<256x128xf32>
    %28 = arith.subf %22, %27 : vector<256x128xf32>
    %c0_15 = arith.constant 0 : index
    %c0_16 = arith.constant 0 : index
    %29 = vector.load %arg5[%c0_15, %c0_16] : memref<256x128xf32, #tpu.memory_space<vmem>>, vector<256x128xf32>
    tpu.vector_store %arg5[%c0_15, %c0_16], %28 {strides = array<i32>} : memref<256x128xf32, #tpu.memory_space<vmem>>, vector<256x128xf32>,
    return
  }
  func.func @transform_0(%arg0: i32) -> (i32, i32) {
    %c0_i32 = arith.constant 0 : i32
    %c0_i32_0 = arith.constant 0 : i32
    %c0_i32_1 = arith.constant 0 : i32
    return %c0_i32, %c0_i32_0 : i32, i32
  }
  func.func @transform_1(%arg0: i32) -> (i32, i32) {
    %c0_i32 = arith.constant 0 : i32
    %c0_i32_0 = arith.constant 0 : i32
    %c0_i32_1 = arith.constant 0 : i32
    return %c0_i32, %c0_i32_0 : i32, i32
  }
  func.func @transform_2(%arg0: i32) -> (i32, i32) {
    %c0_i32 = arith.constant 0 : i32
    %c0_i32_0 = arith.constant 0 : i32
    %c0_i32_1 = arith.constant 0 : i32
    return %c0_i32, %c0_i32_0 : i32, i32
  }
  func.func @transform_3(%arg0: i32) -> (i32, i32) {
    %c0_i32 = arith.constant 0 : i32
    %c0_i32_0 = arith.constant 0 : i32
    %c0_i32_1 = arith.constant 0 : i32
    return %c0_i32, %c0_i32_0 : i32, i32
  }
  func.func @transform_4(%arg0: i32) -> (i32, i32) {
    %c0_i32 = arith.constant 0 : i32
    %c0_i32_0 = arith.constant 0 : i32
    %c0_i32_1 = arith.constant 0 : i32
    return %c0_i32, %c0_i32_0 : i32, i32
  }
}

</mosaic_0001>

<llo_original>
// kernel: gcn_forward.1
$region0: #{gcn_forward.1}
  #allocation0 [shape = 'u32[]', space=smem, size = 0x4, offset = 0x4, fixed_abs, tag = 'smem constant byte address 0x4 - core index']
  #allocation1 [shape = 'u32[144,128]{1,0:T(1,128)}', space=vmem, size = 0x12000, scoped, tag = 'internal scratch']
  %s0 = inlined_call_operand.hbm [shape: bf16[256,256], index: 0, kind: input, shape index: {}]
  %s1 = inlined_call_operand.vmem [shape: bf16[256,32], index: 1, kind: input, shape index: {}]
  %s2 = inlined_call_operand.vmem [shape: bf16[160,128], index: 2, kind: input, shape index: {}]
  %s3 = inlined_call_operand.vmem [shape: f32[16,128], index: 3, kind: input, shape index: {}]
  %s4 = inlined_call_operand.vmem [shape: f32[256,128], index: 4, kind: output, shape index: {}]
  %s5 = sld [smem:[#allocation0]]
  $region30: #{gcn_forward.1} parent=0
    _
  %s7 = ssub.s32 1, %s5
  %s8 = scalar_select 0, %s7, %s5
  $region1: #{gcn_forward.1} parent=0
    #allocation2 [shape = 'u8[131072]{0}', space=vmem, size = 0x20000, scoped, tag = 'input window, operand 0, single buffered']
    #allocation3 [shape = 's32[1]{0}', space=sflag, size = 0x4, scoped, tag = 'scoped memory for gcn_forward.1']
    %9 = vsyncpa [#allocation3], 0
    // Predicated region
    $region2: #{gcn_forward.1} parent=1 // pred_check
      _
    $region3: #{gcn_forward.1} parent=1 // pred_check_branch
      %11 = sbr.rel (0) target = $region5
    $region4: #{gcn_forward.1} parent=1 // pred_region
      %s13 = ssub.s32 4096, 4096
      %14 = vsyncadd [#allocation3], %s13
      %s15 = sshll.u32 [#allocation2], 4
      %s16 = int_to_ptr.vmem [resolvable:$true] %s15
      %21 = dma.hbm_to_vmem [thread:$0]  %s0, 4096, %s16, [#allocation3], 128, 128, 8
    $region5: #{gcn_forward.1} parent=1 // pred_fallthru
      _
    // Predicated region
    $region6: #{gcn_forward.1} parent=1 // pred_check
      _
    $region7: #{gcn_forward.1} parent=1 // pred_check_branch
      %23 = sbr.rel (0) target = $region9
    $region8: #{gcn_forward.1} parent=1 // pred_region
      _
    $region9: #{gcn_forward.1} parent=1 // pred_fallthru
      _
    // Predicated region
    $region10: #{gcn_forward.1} parent=1 // pred_check
      _
    $region11: #{gcn_forward.1} parent=1 // pred_check_branch
      %25 = sbr.rel (0) target = $region13
    $region12: #{gcn_forward.1} parent=1 // pred_region
      _
    $region13: #{gcn_forward.1} parent=1 // pred_fallthru
      _
    // Predicated region
    $region14: #{gcn_forward.1} parent=1 // pred_check
      _
    $region15: #{gcn_forward.1} parent=1 // pred_check_branch
      %27 = sbr.rel (0) target = $region17
    $region16: #{gcn_forward.1} parent=1 // pred_region
      _
    $region17: #{gcn_forward.1} parent=1 // pred_fallthru
      _
    // Predicated region
    $region18: #{gcn_forward.1} parent=1 // pred_check
      _
    $region19: #{gcn_forward.1} parent=1 // pred_check_branch
      %29 = sbr.rel (0) target = $region21
    $region20: #{gcn_forward.1} parent=1 // pred_region
      %30 = dma.done [#allocation3], 4096
    $region21: #{gcn_forward.1} parent=1 // pred_fallthru
      _
    %v32 = vld [vmem:[#allocation2] sm:$0xff]
    %v33 = vld [vmem:[#allocation2 + $0x8] sm:$0xff]
    %v34 = vld [vmem:[#allocation2 + $0x10] sm:$0xff]
    %v35 = vld [vmem:[#allocation2 + $0x18] sm:$0xff]
    %v36 = vld [vmem:[#allocation2 + $0x20] sm:$0xff]
    %v37 = vld [vmem:[#allocation2 + $0x28] sm:$0xff]
    %v38 = vld [vmem:[#allocation2 + $0x30] sm:$0xff]
    %v39 = vld [vmem:[#allocation2 + $0x38] sm:$0xff]
    %v40 = vld [vmem:[#allocation2 + $0x40] sm:$0xff]
    %v41 = vld [vmem:[#allocation2 + $0x48] sm:$0xff]
    %v42 = vld [vmem:[#allocation2 + $0x50] sm:$0xff]
    %v43 = vld [vmem:[#allocation2 + $0x58] sm:$0xff]
    %v44 = vld [vmem:[#allocation2 + $0x60] sm:$0xff]
    %v45 = vld [vmem:[#allocation2 + $0x68] sm:$0xff]
    %v46 = vld [vmem:[#allocation2 + $0x70] sm:$0xff]
    %v47 = vld [vmem:[#allocation2 + $0x78] sm:$0xff]
    %v48 = vld [vmem:[#allocation2 + $0x80] sm:$0xff]
    %v49 = vld [vmem:[#allocation2 + $0x88] sm:$0xff]
    %v50 = vld [vmem:[#allocation2 + $0x90] sm:$0xff]
    %v51 = vld [vmem:[#allocation2 + $0x98] sm:$0xff]
    %v52 = vld [vmem:[#allocation2 + $0xa0] sm:$0xff]
    %v53 = vld [vmem:[#allocation2 + $0xa8] sm:$0xff]
    %v54 = vld [vmem:[#allocation2 + $0xb0] sm:$0xff]
    %v55 = vld [vmem:[#allocation2 + $0xb8] sm:$0xff]
    %v56 = vld [vmem:[#allocation2 + $0xc0] sm:$0xff]
    %v57 = vld [vmem:[#allocation2 + $0xc8] sm:$0xff]
    %v58 = vld [vmem:[#allocation2 + $0xd0] sm:$0xff]
    %v59 = vld [vmem:[#allocation2 + $0xd8] sm:$0xff]
    %v60 = vld [vmem:[#allocation2 + $0xe0] sm:$0xff]
    %v61 = vld [vmem:[#allocation2 + $0xe8] sm:$0xff]
    %v62 = vld [vmem:[#allocation2 + $0xf0] sm:$0xff]
    %v63 = vld [vmem:[#allocation2 + $0xf8] sm:$0xff]
    %v64 = vld [vmem:[%s1] sm:$0xf]
    %v65 = vld [vmem:[%s1 + $0x4] sm:$0xf]
    %v66 = vld [vmem:[%s1 + $0x8] sm:$0xf]
    %v67 = vld [vmem:[%s1 + $0xc] sm:$0xf]
    %v68 = vld [vmem:[%s1 + $0x10] sm:$0xf]
    %v69 = vld [vmem:[%s1 + $0x14] sm:$0xf]
    %v70 = vld [vmem:[%s1 + $0x18] sm:$0xf]
    %v71 = vld [vmem:[%s1 + $0x1c] sm:$0xf]
    %v72 = vld [vmem:[%s1 + $0x20] sm:$0xf]
    %v73 = vld [vmem:[%s1 + $0x24] sm:$0xf]
    %v74 = vld [vmem:[%s1 + $0x28] sm:$0xf]
    %v75 = vld [vmem:[%s1 + $0x2c] sm:$0xf]
    %v76 = vld [vmem:[%s1 + $0x30] sm:$0xf]
    %v77 = vld [vmem:[%s1 + $0x34] sm:$0xf]
    %v78 = vld [vmem:[%s1 + $0x38] sm:$0xf]
    %v79 = vld [vmem:[%s1 + $0x3c] sm:$0xf]
    %v80 = vld [vmem:[%s1 + $0x40] sm:$0xf]
    %v81 = vld [vmem:[%s1 + $0x44] sm:$0xf]
    %v82 = vld [vmem:[%s1 + $0x48] sm:$0xf]
    %v83 = vld [vmem:[%s1 + $0x4c] sm:$0xf]
    %v84 = vld [vmem:[%s1 + $0x50] sm:$0xf]
    %v85 = vld [vmem:[%s1 + $0x54] sm:$0xf]
    %v86 = vld [vmem:[%s1 + $0x58] sm:$0xf]
    %v87 = vld [vmem:[%s1 + $0x5c] sm:$0xf]
    %v88 = vld [vmem:[%s1 + $0x60] sm:$0xf]
    %v89 = vld [vmem:[%s1 + $0x64] sm:$0xf]
    %v90 = vld [vmem:[%s1 + $0x68] sm:$0xf]
    %v91 = vld [vmem:[%s1 + $0x6c] sm:$0xf]
    %v92 = vld [vmem:[%s1 + $0x70] sm:$0xf]
    %v93 = vld [vmem:[%s1 + $0x74] sm:$0xf]
    %v94 = vld [vmem:[%s1 + $0x78] sm:$0xf]
    %v95 = vld [vmem:[%s1 + $0x7c] sm:$0xf]
    %v96 = vld [vmem:[%s2] sm:$0xf]
    %v97 = vld [vmem:[%s2 + $0x4] sm:$0xf]
    %v98 = vld [vmem:[%s2 + $0x8] sm:$0xf]
    %v99 = vld [vmem:[%s2 + $0xc] sm:$0xf]
    %v100 = vld [vmem:[%s2 + $0x10] sm:$0xf]
    %v101 = vld [vmem:[%s2 + $0x14] sm:$0xf]
    %v102 = vld [vmem:[%s2 + $0x18] sm:$0xf]
    %v103 = vld [vmem:[%s2 + $0x1c] sm:$0xf]
    %v104 = vld [vmem:[%s2 + $0x20] sm:$0xf]
    %v105 = vld [vmem:[%s2 + $0x24] sm:$0xf]
    %v106 = vld [vmem:[%s2 + $0x28] sm:$0xf]
    %v107 = vld [vmem:[%s2 + $0x2c] sm:$0xf]
    %v108 = vld [vmem:[%s2 + $0x30] sm:$0xf]
    %v109 = vld [vmem:[%s2 + $0x34] sm:$0xf]
    %v110 = vld [vmem:[%s2 + $0x38] sm:$0xf]
    %v111 = vld [vmem:[%s2 + $0x3c] sm:$0xf]
    %v112 = vld [vmem:[%s2 + $0x40] sm:$0xf]
    %v113 = vld [vmem:[%s2 + $0x44] sm:$0xf]
    %v114 = vld [vmem:[%s2 + $0x48] sm:$0xf]
    %v115 = vld [vmem:[%s2 + $0x4c] sm:$0xf]
    %v116 = vld [vmem:[%s3] sm:$0x1]
    %v117 = vld [vmem:[%s3 + $0x8] sm:$0x1]
    %v150 = vunpack.c.l.b16 %v64
    %v151 = vunpack.c.l.b16 %v65
    %v152 = vunpack.c.l.b16 %v66
    %v153 = vunpack.c.l.b16 %v67
    %v154 = vunpack.c.l.b16 %v68
    %v155 = vunpack.c.l.b16 %v69
    %v156 = vunpack.c.l.b16 %v70
    %v157 = vunpack.c.l.b16 %v71
    %v158 = vunpack.c.l.b16 %v72
    %v159 = vunpack.c.l.b16 %v73
    %v160 = vunpack.c.l.b16 %v74
    %v161 = vunpack.c.l.b16 %v75
    %v162 = vunpack.c.l.b16 %v76
    %v163 = vunpack.c.l.b16 %v77
    %v164 = vunpack.c.l.b16 %v78
    %v165 = vunpack.c.l.b16 %v79
    %v166 = vunpack.c.l.b16 %v80
    %v167 = vunpack.c.l.b16 %v81
    %v168 = vunpack.c.l.b16 %v82
    %v169 = vunpack.c.l.b16 %v83
    %v170 = vunpack.c.l.b16 %v84
    %v171 = vunpack.c.l.b16 %v85
    %v172 = vunpack.c.l.b16 %v86
    %v173 = vunpack.c.l.b16 %v87
    %v174 = vunpack.c.l.b16 %v88
    %v175 = vunpack.c.l.b16 %v89
    %v176 = vunpack.c.l.b16 %v90
    %v177 = vunpack.c.l.b16 %v91
    %v178 = vunpack.c.l.b16 %v92
    %v179 = vunpack.c.l.b16 %v93
    %v180 = vunpack.c.l.b16 %v94
    %v181 = vunpack.c.l.b16 %v95
    %v182 = vpack.c.b16 %v151, %v150
    %v183 = vpack.c.b16 %v153, %v152
    %v184 = vpack.c.b16 %v155, %v154
    %v185 = vpack.c.b16 %v157, %v156
    %v186 = vpack.c.b16 %v159, %v158
    %v187 = vpack.c.b16 %v161, %v160
    %v188 = vpack.c.b16 %v163, %v162
    %v189 = vpack.c.b16 %v165, %v164
    %v190 = vpack.c.b16 %v167, %v166
    %v191 = vpack.c.b16 %v169, %v168
    %v192 = vpack.c.b16 %v171, %v170
    %v193 = vpack.c.b16 %v173, %v172
    %v194 = vpack.c.b16 %v175, %v174
    %v195 = vpack.c.b16 %v177, %v176
    %v196 = vpack.c.b16 %v179, %v178
    %v197 = vpack.c.b16 %v181, %v180
    %v202 = vunpack.c.l.b16 %v96
    %v203 = vunpack.c.l.b16 %v97
    %v204 = vunpack.c.l.b16 %v98
    %v205 = vunpack.c.l.b16 %v99
    %v206 = vpack.c.b16 %v203, %v202
    %v207 = vpack.c.b16 %v205, %v204
    %vm210 = vcmask 261120
    %v212 = vsel %vm210, %v182, 0
    %v215 = vsel %vm210, %v183, 0
    %v218 = vsel %vm210, %v184, 0
    %v221 = vsel %vm210, %v185, 0
    %v224 = vsel %vm210, %v186, 0
    %v227 = vsel %vm210, %v187, 0
    %v230 = vsel %vm210, %v188, 0
    %v233 = vsel %vm210, %v189, 0
    %v236 = vsel %vm210, %v190, 0
    %v239 = vsel %vm210, %v191, 0
    %v242 = vsel %vm210, %v192, 0
    %v245 = vsel %vm210, %v193, 0
    %v248 = vsel %vm210, %v194, 0
    %v251 = vsel %vm210, %v195, 0
    %v254 = vsel %vm210, %v196, 0
    %v257 = vsel %vm210, %v197, 0
    %259 = vmatprep.subr.bf16.mxu0 0
    %260 = vmatpush1.bf16.msra.mxu0 0
    %261 = vmatprep.subr.bf16.mxu0 0
    %262 = vmatpush1.bf16.msra.mxu0 0
    %263 = vmatprep.subr.bf16.mxu0 0
    %264 = vmatpush1.bf16.msra.mxu0 0
    %265 = vmatprep.subr.bf16.mxu0 0
    %266 = vmatpush1.bf16.msra.mxu0 0
    %267 = vmatprep.subr.bf16.mxu0 0
    %268 = vmatpush1.bf16.msra.mxu0 0
    %269 = vmatprep.subr.bf16.mxu0 0
    %270 = vmatpush1.bf16.msra.mxu0 0
    %271 = vmatprep.subr.bf16.mxu0 0
    %272 = vmatpush1.bf16.msra.mxu0 %v207
    %273 = vmatprep.subr.bf16.mxu0 0
    %274 = vmatpush1.bf16.msra.mxu0 %v206
    %275 = vmatprep.subr.bf16.mxu0 0
    %276 = vmatpush2.bf16.msra.mxu0 0
    %277 = vmatprep.subr.bf16.mxu0 0
    %278 = vmatpush2.bf16.msra.mxu0 0
    %279 = vmatprep.subr.bf16.mxu0 0
    %280 = vmatpush2.bf16.msra.mxu0 0
    %281 = vmatprep.subr.bf16.mxu0 0
    %282 = vmatpush2.bf16.msra.mxu0 0
    %283 = vmatprep.subr.bf16.mxu0 0
    %284 = vmatpush2.bf16.msra.mxu0 0
    %285 = vmatprep.subr.bf16.mxu0 0
    %286 = vmatpush2.bf16.msra.mxu0 0
    %287 = vmatprep.subr.bf16.mxu0 0
    %288 = vmatpush2.bf16.msra.mxu0 0
    %289 = vmatprep.subr.bf16.mxu0 0
    %290 = vmatpush2.bf16.msra.mxu0 0
    %291 = vmatprep.mubr.bf16.mxu0 0
    %292 = vmatmul.mubr.bf16.gmra.mxu0 %v212
    %v293 = vpop.f32.mrf.mxu0
    %v294 = vadd.f32 0.0, %v293
    %v295 = vpop.f32.mrf.mxu0
    %v296 = vpop.f32.mrf.mxu0
    %v297 = vadd.f32 0.0, %v296
    %v298 = vpop.f32.mrf.mxu0
    %299 = vmatprep.mubr.bf16.mxu0 0
    %300 = vmatmul.mubr.bf16.gmra.mxu0 %v215
    %v301 = vpop.f32.mrf.mxu0
    %v302 = vadd.f32 0.0, %v301
    %v303 = vpop.f32.mrf.mxu0
    %v304 = vpop.f32.mrf.mxu0
    %v305 = vadd.f32 0.0, %v304
    %v306 = vpop.f32.mrf.mxu0
    %307 = vmatprep.mubr.bf16.mxu0 0
    %308 = vmatmul.mubr.bf16.gmra.mxu0 %v218
    %v309 = vpop.f32.mrf.mxu0
    %v310 = vadd.f32 0.0, %v309
    %v311 = vpop.f32.mrf.mxu0
    %v312 = vpop.f32.mrf.mxu0
    %v313 = vadd.f32 0.0, %v312
    %v314 = vpop.f32.mrf.mxu0
    %315 = vmatprep.mubr.bf16.mxu0 0
    %316 = vmatmul.mubr.bf16.gmra.mxu0 %v221
    %v317 = vpop.f32.mrf.mxu0
    %v318 = vadd.f32 0.0, %v317
    %v319 = vpop.f32.mrf.mxu0
    %v320 = vpop.f32.mrf.mxu0
    %v321 = vadd.f32 0.0, %v320
    %v322 = vpop.f32.mrf.mxu0
    %323 = vmatprep.mubr.bf16.mxu0 0
    %324 = vmatmul.mubr.bf16.gmra.mxu0 %v224
    %v325 = vpop.f32.mrf.mxu0
    %v326 = vadd.f32 0.0, %v325
    %v327 = vpop.f32.mrf.mxu0
    %v328 = vpop.f32.mrf.mxu0
    %v329 = vadd.f32 0.0, %v328
    %v330 = vpop.f32.mrf.mxu0
    %331 = vmatprep.mubr.bf16.mxu0 0
    %332 = vmatmul.mubr.bf16.gmra.mxu0 %v227
    %v333 = vpop.f32.mrf.mxu0
    %v334 = vadd.f32 0.0, %v333
    %v335 = vpop.f32.mrf.mxu0
    %v336 = vpop.f32.mrf.mxu0
    %v337 = vadd.f32 0.0, %v336
    %v338 = vpop.f32.mrf.mxu0
    %339 = vmatprep.mubr.bf16.mxu0 0
    %340 = vmatmul.mubr.bf16.gmra.mxu0 %v230
    %v341 = vpop.f32.mrf.mxu0
    %v342 = vadd.f32 0.0, %v341
    %v343 = vpop.f32.mrf.mxu0
    %v344 = vpop.f32.mrf.mxu0
    %v345 = vadd.f32 0.0, %v344
    %v346 = vpop.f32.mrf.mxu0
    %347 = vmatprep.mubr.bf16.mxu0 0
    %348 = vmatmul.mubr.bf16.gmra.mxu0 %v233
    %v349 = vpop.f32.mrf.mxu0
    %v350 = vadd.f32 0.0, %v349
    %v351 = vpop.f32.mrf.mxu0
    %v352 = vpop.f32.mrf.mxu0
    %v353 = vadd.f32 0.0, %v352
    %v354 = vpop.f32.mrf.mxu0
    %355 = vmatprep.mubr.bf16.mxu0 0
    %356 = vmatmul.mubr.bf16.gmra.mxu0 %v236
    %v357 = vpop.f32.mrf.mxu0
    %v358 = vadd.f32 0.0, %v357
    %v359 = vpop.f32.mrf.mxu0
    %v360 = vpop.f32.mrf.mxu0
    %v361 = vadd.f32 0.0, %v360
    %v362 = vpop.f32.mrf.mxu0
    %363 = vmatprep.mubr.bf16.mxu0 0
    %364 = vmatmul.mubr.bf16.gmra.mxu0 %v239
    %v365 = vpop.f32.mrf.mxu0
    %v366 = vadd.f32 0.0, %v365
    %v367 = vpop.f32.mrf.mxu0
    %v368 = vpop.f32.mrf.mxu0
    %v369 = vadd.f32 0.0, %v368
    %v370 = vpop.f32.mrf.mxu0
    %371 = vmatprep.mubr.bf16.mxu0 0
    %372 = vmatmul.mubr.bf16.gmra.mxu0 %v242
    %v373 = vpop.f32.mrf.mxu0
    %v374 = vadd.f32 0.0, %v373
    %v375 = vpop.f32.mrf.mxu0
    %v376 = vpop.f32.mrf.mxu0
    %v377 = vadd.f32 0.0, %v376
    %v378 = vpop.f32.mrf.mxu0
    %379 = vmatprep.mubr.bf16.mxu0 0
    %380 = vmatmul.mubr.bf16.gmra.mxu0 %v245
    %v381 = vpop.f32.mrf.mxu0
    %v382 = vadd.f32 0.0, %v381
    %v383 = vpop.f32.mrf.mxu0
    %v384 = vpop.f32.mrf.mxu0
    %v385 = vadd.f32 0.0, %v384
    %v386 = vpop.f32.mrf.mxu0
    %387 = vmatprep.mubr.bf16.mxu0 0
    %388 = vmatmul.mubr.bf16.gmra.mxu0 %v248
    %v389 = vpop.f32.mrf.mxu0
    %v390 = vadd.f32 0.0, %v389
    %v391 = vpop.f32.mrf.mxu0
    %v392 = vpop.f32.mrf.mxu0
    %v393 = vadd.f32 0.0, %v392
    %v394 = vpop.f32.mrf.mxu0
    %395 = vmatprep.mubr.bf16.mxu0 0
    %396 = vmatmul.mubr.bf16.gmra.mxu0 %v251
    %v397 = vpop.f32.mrf.mxu0
    %v398 = vadd.f32 0.0, %v397
    %v399 = vpop.f32.mrf.mxu0
    %v400 = vpop.f32.mrf.mxu0
    %v401 = vadd.f32 0.0, %v400
    %v402 = vpop.f32.mrf.mxu0
    %403 = vmatprep.mubr.bf16.mxu0 0
    %404 = vmatmul.mubr.bf16.gmra.mxu0 %v254
    %v405 = vpop.f32.mrf.mxu0
    %v406 = vadd.f32 0.0, %v405
    %v407 = vpop.f32.mrf.mxu0
    %v408 = vpop.f32.mrf.mxu0
    %v409 = vadd.f32 0.0, %v408
    %v410 = vpop.f32.mrf.mxu0
    %411 = vmatprep.mubr.bf16.mxu0 0
    %412 = vmatmul.mubr.bf16.gmra.mxu0 %v257
    %v413 = vpop.f32.mrf.mxu0
    %v414 = vadd.f32 0.0, %v413
    %v415 = vpop.f32.mrf.mxu0
    %v416 = vpop.f32.mrf.mxu0
    %v417 = vadd.f32 0.0, %v416
    %v418 = vpop.f32.mrf.mxu0
    %419 = vdwg.mxu0
    %v420 = vpack.c.bf16 %v297, %v294
    %v421 = vpack.c.bf16 %v305, %v302
    %v422 = vpack.c.bf16 %v313, %v310
    %v423 = vpack.c.bf16 %v321, %v318
    %v424 = vpack.c.bf16 %v329, %v326
    %v425 = vpack.c.bf16 %v337, %v334
    %v426 = vpack.c.bf16 %v345, %v342
    %v427 = vpack.c.bf16 %v353, %v350
    %v428 = vpack.c.bf16 %v361, %v358
    %v429 = vpack.c.bf16 %v369, %v366
    %v430 = vpack.c.bf16 %v377, %v374
    %v431 = vpack.c.bf16 %v385, %v382
    %v432 = vpack.c.bf16 %v393, %v390
    %v433 = vpack.c.bf16 %v401, %v398
    %v434 = vpack.c.bf16 %v409, %v406
    %v435 = vpack.c.bf16 %v417, %v414
    %v436 = vlaneseq
    %v437 = vshrl.u32 %v436, 7
    %v438 = vsub.s32 0, %v437
    %v439 = vrot.slane %v116, %v438
    %v472 = vunpack.c.l.b16 %v32
    %v473 = vunpack.c.h.b16 %v32
    %v474 = vunpack.c.l.b16 %v33
    %v475 = vunpack.c.h.b16 %v33
    %v476 = vunpack.c.l.b16 %v34
    %v477 = vunpack.c.h.b16 %v34
    %v478 = vunpack.c.l.b16 %v35
    %v479 = vunpack.c.h.b16 %v35
    %v480 = vunpack.c.l.b16 %v36
    %v481 = vunpack.c.h.b16 %v36
    %v482 = vunpack.c.l.b16 %v37
    %v483 = vunpack.c.h.b16 %v37
    %v484 = vunpack.c.l.b16 %v38
    %v485 = vunpack.c.h.b16 %v38
    %v486 = vunpack.c.l.b16 %v39
    %v487 = vunpack.c.h.b16 %v39
    %v488 = vunpack.c.l.b16 %v40
    %v489 = vunpack.c.h.b16 %v40
    %v490 = vunpack.c.l.b16 %v41
    %v491 = vunpack.c.h.b16 %v41
    %v492 = vunpack.c.l.b16 %v42
    %v493 = vunpack.c.h.b16 %v42
    %v494 = vunpack.c.l.b16 %v43
    %v495 = vunpack.c.h.b16 %v43
    %v496 = vunpack.c.l.b16 %v44
    %v497 = vunpack.c.h.b16 %v44
    %v498 = vunpack.c.l.b16 %v45
    %v499 = vunpack.c.h.b16 %v45
    %v500 = vunpack.c.l.b16 %v46
    %v501 = vunpack.c.h.b16 %v46
    %v502 = vunpack.c.l.b16 %v47
    %v503 = vunpack.c.h.b16 %v47
    %v504 = vunpack.c.l.b16 %v48
    %v505 = vunpack.c.h.b16 %v48
    %v506 = vunpack.c.l.b16 %v49
    %v507 = vunpack.c.h.b16 %v49
    %v508 = vunpack.c.l.b16 %v50
    %v509 = vunpack.c.h.b16 %v50
    %v510 = vunpack.c.l.b16 %v51
    %v511 = vunpack.c.h.b16 %v51
    %v512 = vunpack.c.l.b16 %v52
    %v513 = vunpack.c.h.b16 %v52
    %v514 = vunpack.c.l.b16 %v53
    %v515 = vunpack.c.h.b16 %v53
    %v516 = vunpack.c.l.b16 %v54
    %v517 = vunpack.c.h.b16 %v54
    %v518 = vunpack.c.l.b16 %v55
    %v519 = vunpack.c.h.b16 %v55
    %v520 = vunpack.c.l.b16 %v56
    %v521 = vunpack.c.h.b16 %v56
    %v522 = vunpack.c.l.b16 %v57
    %v523 = vunpack.c.h.b16 %v57
    %v524 = vunpack.c.l.b16 %v58
    %v525 = vunpack.c.h.b16 %v58
    %v526 = vunpack.c.l.b16 %v59
    %v527 = vunpack.c.h.b16 %v59
    %v528 = vunpack.c.l.b16 %v60
    %v529 = vunpack.c.h.b16 %v60
    %v530 = vunpack.c.l.b16 %v61
    %v531 = vunpack.c.h.b16 %v61
    %v532 = vunpack.c.l.b16 %v62
    %v533 = vunpack.c.h.b16 %v62
    %v534 = vunpack.c.l.b16 %v63
    %v535 = vunpack.c.h.b16 %v63
    %v536 = vpack.c.b16 %v474, %v472
    %v537 = vpack.c.b16 %v475, %v473
    %v538 = vpack.c.b16 %v478, %v476
    %v539 = vpack.c.b16 %v479, %v477
    %v540 = vpack.c.b16 %v482, %v480
    %v541 = vpack.c.b16 %v483, %v481
    %v542 = vpack.c.b16 %v486, %v484
    %v543 = vpack.c.b16 %v487, %v485
    %v544 = vpack.c.b16 %v490, %v488
    %v545 = vpack.c.b16 %v491, %v489
    %v546 = vpack.c.b16 %v494, %v492
    %v547 = vpack.c.b16 %v495, %v493
    %v548 = vpack.c.b16 %v498, %v496
    %v549 = vpack.c.b16 %v499, %v497
    %v550 = vpack.c.b16 %v502, %v500
    %v551 = vpack.c.b16 %v503, %v501
    %v552 = vpack.c.b16 %v506, %v504
    %v553 = vpack.c.b16 %v507, %v505
    %v554 = vpack.c.b16 %v510, %v508
    %v555 = vpack.c.b16 %v511, %v509
    %v556 = vpack.c.b16 %v514, %v512
    %v557 = vpack.c.b16 %v515, %v513
    %v558 = vpack.c.b16 %v518, %v516
    %v559 = vpack.c.b16 %v519, %v517
    %v560 = vpack.c.b16 %v522, %v520
    %v561 = vpack.c.b16 %v523, %v521
    %v562 = vpack.c.b16 %v526, %v524
    %v563 = vpack.c.b16 %v527, %v525
    %v564 = vpack.c.b16 %v530, %v528
    %v565 = vpack.c.b16 %v531, %v529
    %v566 = vpack.c.b16 %v534, %v532
    %v567 = vpack.c.b16 %v535, %v533
    %600 = vmatprep.subr.bf16.mxu0 0
    %601 = vmatpush1.bf16.msra.mxu0 %v427
    %602 = vmatprep.subr.bf16.mxu0 0
    %603 = vmatpush1.bf16.msra.mxu0 %v426
    %604 = vmatprep.subr.bf16.mxu0 0
    %605 = vmatpush1.bf16.msra.mxu0 %v425
    %606 = vmatprep.subr.bf16.mxu0 0
    %607 = vmatpush1.bf16.msra.mxu0 %v424
    %608 = vmatprep.subr.bf16.mxu0 0
    %609 = vmatpush1.bf16.msra.mxu0 %v423
    %610 = vmatprep.subr.bf16.mxu0 0
    %611 = vmatpush1.bf16.msra.mxu0 %v422
    %612 = vmatprep.subr.bf16.mxu0 0
    %613 = vmatpush1.bf16.msra.mxu0 %v421
    %614 = vmatprep.subr.bf16.mxu0 0
    %615 = vmatpush1.bf16.msra.mxu0 %v420
    %616 = vmatprep.subr.bf16.mxu0 0
    %617 = vmatpush2.bf16.msra.mxu0 %v435
    %618 = vmatprep.subr.bf16.mxu0 0
    %619 = vmatpush2.bf16.msra.mxu0 %v434
    %620 = vmatprep.subr.bf16.mxu0 0
    %621 = vmatpush2.bf16.msra.mxu0 %v433
    %622 = vmatprep.subr.bf16.mxu0 0
    %623 = vmatpush2.bf16.msra.mxu0 %v432
    %624 = vmatprep.subr.bf16.mxu0 0
    %625 = vmatpush2.bf16.msra.mxu0 %v431
    %626 = vmatprep.subr.bf16.mxu0 0
    %627 = vmatpush2.bf16.msra.mxu0 %v430
    %628 = vmatprep.subr.bf16.mxu0 0
    %629 = vmatpush2.bf16.msra.mxu0 %v429
    %630 = vmatprep.subr.bf16.mxu0 0
    %631 = vmatpush2.bf16.msra.mxu0 %v428
    %632 = vmatprep.mubr.bf16.mxu0 %v537
    %633 = vmatmul.mubr.bf16.gmra.mxu0 %v536
    %v634 = vpop.f32.mrf.mxu0
    %v635 = vadd.f32 %v439, %v634
    %v636 = vpop.f32.mrf.mxu0
    %v637 = vpop.f32.mrf.mxu0
    %v638 = vadd.f32 %v439, %v637
    %v639 = vpop.f32.mrf.mxu0
    %640 = vmatprep.mubr.bf16.mxu0 %v539
    %641 = vmatmul.mubr.bf16.gmra.mxu0 %v538
    %v642 = vpop.f32.mrf.mxu0
    %v643 = vadd.f32 %v439, %v642
    %v644 = vpop.f32.mrf.mxu0
    %v645 = vpop.f32.mrf.mxu0
    %v646 = vadd.f32 %v439, %v645
    %v647 = vpop.f32.mrf.mxu0
    %648 = vmatprep.mubr.bf16.mxu0 %v541
    %649 = vmatmul.mubr.bf16.gmra.mxu0 %v540
    %v650 = vpop.f32.mrf.mxu0
    %v651 = vadd.f32 %v439, %v650
    %v652 = vpop.f32.mrf.mxu0
    %v653 = vpop.f32.mrf.mxu0
    %v654 = vadd.f32 %v439, %v653
    %v655 = vpop.f32.mrf.mxu0
    %656 = vmatprep.mubr.bf16.mxu0 %v543
    %657 = vmatmul.mubr.bf16.gmra.mxu0 %v542
    %v658 = vpop.f32.mrf.mxu0
    %v659 = vadd.f32 %v439, %v658
    %v660 = vpop.f32.mrf.mxu0
    %v661 = vpop.f32.mrf.mxu0
    %v662 = vadd.f32 %v439, %v661
    %v663 = vpop.f32.mrf.mxu0
    %664 = vmatprep.mubr.bf16.mxu0 %v545
    %665 = vmatmul.mubr.bf16.gmra.mxu0 %v544
    %v666 = vpop.f32.mrf.mxu0
    %v667 = vadd.f32 %v439, %v666
    %v668 = vpop.f32.mrf.mxu0
    %v669 = vpop.f32.mrf.mxu0
    %v670 = vadd.f32 %v439, %v669
    %v671 = vpop.f32.mrf.mxu0
    %672 = vmatprep.mubr.bf16.mxu0 %v547
    %673 = vmatmul.mubr.bf16.gmra.mxu0 %v546
    %v674 = vpop.f32.mrf.mxu0
    %v675 = vadd.f32 %v439, %v674
    %v676 = vpop.f32.mrf.mxu0
    %v677 = vpop.f32.mrf.mxu0
    %v678 = vadd.f32 %v439, %v677
    %v679 = vpop.f32.mrf.mxu0
    %680 = vmatprep.mubr.bf16.mxu0 %v549
    %681 = vmatmul.mubr.bf16.gmra.mxu0 %v548
    %v682 = vpop.f32.mrf.mxu0
    %v683 = vadd.f32 %v439, %v682
    %v684 = vpop.f32.mrf.mxu0
    %v685 = vpop.f32.mrf.mxu0
    %v686 = vadd.f32 %v439, %v685
    %v687 = vpop.f32.mrf.mxu0
    %688 = vmatprep.mubr.bf16.mxu0 %v551
    %689 = vmatmul.mubr.bf16.gmra.mxu0 %v550
    %v690 = vpop.f32.mrf.mxu0
    %v691 = vadd.f32 %v439, %v690
    %v692 = vpop.f32.mrf.mxu0
    %v693 = vpop.f32.mrf.mxu0
    %v694 = vadd.f32 %v439, %v693
    %v695 = vpop.f32.mrf.mxu0
    %696 = vmatprep.mubr.bf16.mxu0 %v553
    %697 = vmatmul.mubr.bf16.gmra.mxu0 %v552
    %v698 = vpop.f32.mrf.mxu0
    %v699 = vadd.f32 %v439, %v698
    %v700 = vpop.f32.mrf.mxu0
    %v701 = vpop.f32.mrf.mxu0
    %v702 = vadd.f32 %v439, %v701
    %v703 = vpop.f32.mrf.mxu0
    %704 = vmatprep.mubr.bf16.mxu0 %v555
    %705 = vmatmul.mubr.bf16.gmra.mxu0 %v554
    %v706 = vpop.f32.mrf.mxu0
    %v707 = vadd.f32 %v439, %v706
    %v708 = vpop.f32.mrf.mxu0
    %v709 = vpop.f32.mrf.mxu0
    %v710 = vadd.f32 %v439, %v709
    %v711 = vpop.f32.mrf.mxu0
    %712 = vmatprep.mubr.bf16.mxu0 %v557
    %713 = vmatmul.mubr.bf16.gmra.mxu0 %v556
    %v714 = vpop.f32.mrf.mxu0
    %v715 = vadd.f32 %v439, %v714
    %v716 = vpop.f32.mrf.mxu0
    %v717 = vpop.f32.mrf.mxu0
    %v718 = vadd.f32 %v439, %v717
    %v719 = vpop.f32.mrf.mxu0
    %720 = vmatprep.mubr.bf16.mxu0 %v559
    %721 = vmatmul.mubr.bf16.gmra.mxu0 %v558
    %v722 = vpop.f32.mrf.mxu0
    %v723 = vadd.f32 %v439, %v722
    %v724 = vpop.f32.mrf.mxu0
    %v725 = vpop.f32.mrf.mxu0
    %v726 = vadd.f32 %v439, %v725
    %v727 = vpop.f32.mrf.mxu0
    %728 = vmatprep.mubr.bf16.mxu0 %v561
    %729 = vmatmul.mubr.bf16.gmra.mxu0 %v560
    %v730 = vpop.f32.mrf.mxu0
    %v731 = vadd.f32 %v439, %v730
    %v732 = vpop.f32.mrf.mxu0
    %v733 = vpop.f32.mrf.mxu0
    %v734 = vadd.f32 %v439, %v733
    %v735 = vpop.f32.mrf.mxu0
    %736 = vmatprep.mubr.bf16.mxu0 %v563
    %737 = vmatmul.mubr.bf16.gmra.mxu0 %v562
    %v738 = vpop.f32.mrf.mxu0
    %v739 = vadd.f32 %v439, %v738
    %v740 = vpop.f32.mrf.mxu0
    %v741 = vpop.f32.mrf.mxu0
    %v742 = vadd.f32 %v439, %v741
    %v743 = vpop.f32.mrf.mxu0
    %744 = vmatprep.mubr.bf16.mxu0 %v565
    %745 = vmatmul.mubr.bf16.gmra.mxu0 %v564
    %v746 = vpop.f32.mrf.mxu0
    %v747 = vadd.f32 %v439, %v746
    %v748 = vpop.f32.mrf.mxu0
    %v749 = vpop.f32.mrf.mxu0
    %v750 = vadd.f32 %v439, %v749
    %v751 = vpop.f32.mrf.mxu0
    %752 = vmatprep.mubr.bf16.mxu0 %v567
    %753 = vmatmul.mubr.bf16.gmra.mxu0 %v566
    %v754 = vpop.f32.mrf.mxu0
    %v755 = vadd.f32 %v439, %v754
    %v756 = vpop.f32.mrf.mxu0
    %v757 = vpop.f32.mrf.mxu0
    %v758 = vadd.f32 %v439, %v757
    %v759 = vpop.f32.mrf.mxu0
    %760 = vdwg.mxu0
    %v761 = vmax.f32 %v635, 0.0
    %v762 = vmax.f32 %v638, 0.0
    %v763 = vmax.f32 %v643, 0.0
    %v764 = vmax.f32 %v646, 0.0
    %v765 = vmax.f32 %v651, 0.0
    %v766 = vmax.f32 %v654, 0.0
    %v767 = vmax.f32 %v659, 0.0
    %v768 = vmax.f32 %v662, 0.0
    %v769 = vmax.f32 %v667, 0.0
    %v770 = vmax.f32 %v670, 0.0
    %v771 = vmax.f32 %v675, 0.0
    %v772 = vmax.f32 %v678, 0.0
    %v773 = vmax.f32 %v683, 0.0
    %v774 = vmax.f32 %v686, 0.0
    %v775 = vmax.f32 %v691, 0.0
    %v776 = vmax.f32 %v694, 0.0
    %v777 = vmax.f32 %v699, 0.0
    %v778 = vmax.f32 %v702, 0.0
    %v779 = vmax.f32 %v707, 0.0
    %v780 = vmax.f32 %v710, 0.0
    %v781 = vmax.f32 %v715, 0.0
    %v782 = vmax.f32 %v718, 0.0
    %v783 = vmax.f32 %v723, 0.0
    %v784 = vmax.f32 %v726, 0.0
    %v785 = vmax.f32 %v731, 0.0
    %v786 = vmax.f32 %v734, 0.0
    %v787 = vmax.f32 %v739, 0.0
    %v788 = vmax.f32 %v742, 0.0
    %v789 = vmax.f32 %v747, 0.0
    %v790 = vmax.f32 %v750, 0.0
    %v791 = vmax.f32 %v755, 0.0
    %v792 = vmax.f32 %v758, 0.0
    %v793 = vpack.c.bf16 %v762, %v761
    %v794 = vpack.c.bf16 %v764, %v763
    %v795 = vpack.c.bf16 %v766, %v765
    %v796 = vpack.c.bf16 %v768, %v767
    %v797 = vpack.c.bf16 %v770, %v769
    %v798 = vpack.c.bf16 %v772, %v771
    %v799 = vpack.c.bf16 %v774, %v773
    %v800 = vpack.c.bf16 %v776, %v775
    %v801 = vpack.c.bf16 %v778, %v777
    %v802 = vpack.c.bf16 %v780, %v779
    %v803 = vpack.c.bf16 %v782, %v781
    %v804 = vpack.c.bf16 %v784, %v783
    %v805 = vpack.c.bf16 %v786, %v785
    %v806 = vpack.c.bf16 %v788, %v787
    %v807 = vpack.c.bf16 %v790, %v789
    %v808 = vpack.c.bf16 %v792, %v791
    %v825 = vunpack.c.l.b16 %v100
    %v826 = vunpack.c.l.b16 %v101
    %v827 = vunpack.c.l.b16 %v102
    %v828 = vunpack.c.l.b16 %v103
    %v829 = vunpack.c.l.b16 %v104
    %v830 = vunpack.c.l.b16 %v105
    %v831 = vunpack.c.l.b16 %v106
    %v832 = vunpack.c.l.b16 %v107
    %v833 = vunpack.c.l.b16 %v108
    %v834 = vunpack.c.l.b16 %v109
    %v835 = vunpack.c.l.b16 %v110
    %v836 = vunpack.c.l.b16 %v111
    %v837 = vunpack.c.l.b16 %v112
    %v838 = vunpack.c.l.b16 %v113
    %v839 = vunpack.c.l.b16 %v114
    %v840 = vunpack.c.l.b16 %v115
    %v841 = vpack.c.b16 %v826, %v825
    %v842 = vpack.c.b16 %v828, %v827
    %v843 = vpack.c.b16 %v830, %v829
    %v844 = vpack.c.b16 %v832, %v831
    %v845 = vpack.c.b16 %v834, %v833
    %v846 = vpack.c.b16 %v836, %v835
    %v847 = vpack.c.b16 %v838, %v837
    %v848 = vpack.c.b16 %v840, %v839
    %857 = vmatprep.subr.bf16.mxu0 0
    %858 = vmatpush1.bf16.msra.mxu0 %v848
    %859 = vmatprep.subr.bf16.mxu0 0
    %860 = vmatpush1.bf16.msra.mxu0 %v847
    %861 = vmatprep.subr.bf16.mxu0 0
    %862 = vmatpush1.bf16.msra.mxu0 %v846
    %863 = vmatprep.subr.bf16.mxu0 0
    %864 = vmatpush1.bf16.msra.mxu0 %v845
    %865 = vmatprep.subr.bf16.mxu0 0
    %866 = vmatpush1.bf16.msra.mxu0 %v844
    %867 = vmatprep.subr.bf16.mxu0 0
    %868 = vmatpush1.bf16.msra.mxu0 %v843
    %869 = vmatprep.subr.bf16.mxu0 0
    %870 = vmatpush1.bf16.msra.mxu0 %v842
    %871 = vmatprep.subr.bf16.mxu0 0
    %872 = vmatpush1.bf16.msra.mxu0 %v841
    %873 = vmatprep.subr.bf16.mxu0 0
    %874 = vmatpush2.bf16.msra.mxu0 0
    %875 = vmatprep.subr.bf16.mxu0 0
    %876 = vmatpush2.bf16.msra.mxu0 0
    %877 = vmatprep.subr.bf16.mxu0 0
    %878 = vmatpush2.bf16.msra.mxu0 0
    %879 = vmatprep.subr.bf16.mxu0 0
    %880 = vmatpush2.bf16.msra.mxu0 0
    %881 = vmatprep.subr.bf16.mxu0 0
    %882 = vmatpush2.bf16.msra.mxu0 0
    %883 = vmatprep.subr.bf16.mxu0 0
    %884 = vmatpush2.bf16.msra.mxu0 0
    %885 = vmatprep.subr.bf16.mxu0 0
    %886 = vmatpush2.bf16.msra.mxu0 0
    %887 = vmatprep.subr.bf16.mxu0 0
    %888 = vmatpush2.bf16.msra.mxu0 0
    %889 = vmatprep.mubr.bf16.mxu0 0
    %890 = vmatmul.mubr.bf16.gmra.mxu0 %v793
    %v891 = vpop.f32.mrf.mxu0
    %v892 = vadd.f32 0.0, %v891
    %v893 = vpop.f32.mrf.mxu0
    %v894 = vpop.f32.mrf.mxu0
    %v895 = vadd.f32 0.0, %v894
    %v896 = vpop.f32.mrf.mxu0
    %897 = vmatprep.mubr.bf16.mxu0 0
    %898 = vmatmul.mubr.bf16.gmra.mxu0 %v794
    %v899 = vpop.f32.mrf.mxu0
    %v900 = vadd.f32 0.0, %v899
    %v901 = vpop.f32.mrf.mxu0
    %v902 = vpop.f32.mrf.mxu0
    %v903 = vadd.f32 0.0, %v902
    %v904 = vpop.f32.mrf.mxu0
    %905 = vmatprep.mubr.bf16.mxu0 0
    %906 = vmatmul.mubr.bf16.gmra.mxu0 %v795
    %v907 = vpop.f32.mrf.mxu0
    %v908 = vadd.f32 0.0, %v907
    %v909 = vpop.f32.mrf.mxu0
    %v910 = vpop.f32.mrf.mxu0
    %v911 = vadd.f32 0.0, %v910
    %v912 = vpop.f32.mrf.mxu0
    %913 = vmatprep.mubr.bf16.mxu0 0
    %914 = vmatmul.mubr.bf16.gmra.mxu0 %v796
    %v915 = vpop.f32.mrf.mxu0
    %v916 = vadd.f32 0.0, %v915
    %v917 = vpop.f32.mrf.mxu0
    %v918 = vpop.f32.mrf.mxu0
    %v919 = vadd.f32 0.0, %v918
    %v920 = vpop.f32.mrf.mxu0
    %921 = vmatprep.mubr.bf16.mxu0 0
    %922 = vmatmul.mubr.bf16.gmra.mxu0 %v797
    %v923 = vpop.f32.mrf.mxu0
    %v924 = vadd.f32 0.0, %v923
    %v925 = vpop.f32.mrf.mxu0
    %v926 = vpop.f32.mrf.mxu0
    %v927 = vadd.f32 0.0, %v926
    %v928 = vpop.f32.mrf.mxu0
    %929 = vmatprep.mubr.bf16.mxu0 0
    %930 = vmatmul.mubr.bf16.gmra.mxu0 %v798
    %v931 = vpop.f32.mrf.mxu0
    %v932 = vadd.f32 0.0, %v931
    %v933 = vpop.f32.mrf.mxu0
    %v934 = vpop.f32.mrf.mxu0
    %v935 = vadd.f32 0.0, %v934
    %v936 = vpop.f32.mrf.mxu0
    %937 = vmatprep.mubr.bf16.mxu0 0
    %938 = vmatmul.mubr.bf16.gmra.mxu0 %v799
    %v939 = vpop.f32.mrf.mxu0
    %v940 = vadd.f32 0.0, %v939
    %v941 = vpop.f32.mrf.mxu0
    %v942 = vpop.f32.mrf.mxu0
    %v943 = vadd.f32 0.0, %v942
    %v944 = vpop.f32.mrf.mxu0
    %945 = vmatprep.mubr.bf16.mxu0 0
    %946 = vmatmul.mubr.bf16.gmra.mxu0 %v800
    %v947 = vpop.f32.mrf.mxu0
    %v948 = vadd.f32 0.0, %v947
    %v949 = vpop.f32.mrf.mxu0
    %v950 = vpop.f32.mrf.mxu0
    %v951 = vadd.f32 0.0, %v950
    %v952 = vpop.f32.mrf.mxu0
    %953 = vmatprep.mubr.bf16.mxu0 0
    %954 = vmatmul.mubr.bf16.gmra.mxu0 %v801
    %v955 = vpop.f32.mrf.mxu0
    %v956 = vadd.f32 0.0, %v955
    %v957 = vpop.f32.mrf.mxu0
    %v958 = vpop.f32.mrf.mxu0
    %v959 = vadd.f32 0.0, %v958
    %v960 = vpop.f32.mrf.mxu0
    %961 = vmatprep.mubr.bf16.mxu0 0
    %962 = vmatmul.mubr.bf16.gmra.mxu0 %v802
    %v963 = vpop.f32.mrf.mxu0
    %v964 = vadd.f32 0.0, %v963
    %v965 = vpop.f32.mrf.mxu0
    %v966 = vpop.f32.mrf.mxu0
    %v967 = vadd.f32 0.0, %v966
    %v968 = vpop.f32.mrf.mxu0
    %969 = vmatprep.mubr.bf16.mxu0 0
    %970 = vmatmul.mubr.bf16.gmra.mxu0 %v803
    %v971 = vpop.f32.mrf.mxu0
    %v972 = vadd.f32 0.0, %v971
    %v973 = vpop.f32.mrf.mxu0
    %v974 = vpop.f32.mrf.mxu0
    %v975 = vadd.f32 0.0, %v974
    %v976 = vpop.f32.mrf.mxu0
    %977 = vmatprep.mubr.bf16.mxu0 0
    %978 = vmatmul.mubr.bf16.gmra.mxu0 %v804
    %v979 = vpop.f32.mrf.mxu0
    %v980 = vadd.f32 0.0, %v979
    %v981 = vpop.f32.mrf.mxu0
    %v982 = vpop.f32.mrf.mxu0
    %v983 = vadd.f32 0.0, %v982
    %v984 = vpop.f32.mrf.mxu0
    %985 = vmatprep.mubr.bf16.mxu0 0
    %986 = vmatmul.mubr.bf16.gmra.mxu0 %v805
    %v987 = vpop.f32.mrf.mxu0
    %v988 = vadd.f32 0.0, %v987
    %v989 = vpop.f32.mrf.mxu0
    %v990 = vpop.f32.mrf.mxu0
    %v991 = vadd.f32 0.0, %v990
    %v992 = vpop.f32.mrf.mxu0
    %993 = vmatprep.mubr.bf16.mxu0 0
    %994 = vmatmul.mubr.bf16.gmra.mxu0 %v806
    %v995 = vpop.f32.mrf.mxu0
    %v996 = vadd.f32 0.0, %v995
    %v997 = vpop.f32.mrf.mxu0
    %v998 = vpop.f32.mrf.mxu0
    %v999 = vadd.f32 0.0, %v998
    %v1000 = vpop.f32.mrf.mxu0
    %1001 = vmatprep.mubr.bf16.mxu0 0
    %1002 = vmatmul.mubr.bf16.gmra.mxu0 %v807
    %v1003 = vpop.f32.mrf.mxu0
    %v1004 = vadd.f32 0.0, %v1003
    %v1005 = vpop.f32.mrf.mxu0
    %v1006 = vpop.f32.mrf.mxu0
    %v1007 = vadd.f32 0.0, %v1006
    %v1008 = vpop.f32.mrf.mxu0
    %1009 = vmatprep.mubr.bf16.mxu0 0
    %1010 = vmatmul.mubr.bf16.gmra.mxu0 %v808
    %v1011 = vpop.f32.mrf.mxu0
    %v1012 = vadd.f32 0.0, %v1011
    %v1013 = vpop.f32.mrf.mxu0
    %v1014 = vpop.f32.mrf.mxu0
    %v1015 = vadd.f32 0.0, %v1014
    %v1016 = vpop.f32.mrf.mxu0
    %1017 = vdwg.mxu0
    %v1018 = vpack.c.bf16 %v895, %v892
    %v1019 = vpack.c.bf16 %v903, %v900
    %v1020 = vpack.c.bf16 %v911, %v908
    %v1021 = vpack.c.bf16 %v919, %v916
    %v1022 = vpack.c.bf16 %v927, %v924
    %v1023 = vpack.c.bf16 %v935, %v932
    %v1024 = vpack.c.bf16 %v943, %v940
    %v1025 = vpack.c.bf16 %v951, %v948
    %v1026 = vpack.c.bf16 %v959, %v956
    %v1027 = vpack.c.bf16 %v967, %v964
    %v1028 = vpack.c.bf16 %v975, %v972
    %v1029 = vpack.c.bf16 %v983, %v980
    %v1030 = vpack.c.bf16 %v991, %v988
    %v1031 = vpack.c.bf16 %v999, %v996
    %v1032 = vpack.c.bf16 %v1007, %v1004
    %v1033 = vpack.c.bf16 %v1015, %v1012
    %v1034 = vlaneseq
    %v1035 = vshrl.u32 %v1034, 7
    %v1036 = vsub.s32 0, %v1035
    %v1037 = vrot.slane %v117, %v1036
    %1038 = vmatprep.subr.bf16.mxu0 0
    %1039 = vmatpush1.bf16.msra.mxu0 %v1025
    %1040 = vmatprep.subr.bf16.mxu0 0
    %1041 = vmatpush1.bf16.msra.mxu0 %v1024
    %1042 = vmatprep.subr.bf16.mxu0 0
    %1043 = vmatpush1.bf16.msra.mxu0 %v1023
    %1044 = vmatprep.subr.bf16.mxu0 0
    %1045 = vmatpush1.bf16.msra.mxu0 %v1022
    %1046 = vmatprep.subr.bf16.mxu0 0
    %1047 = vmatpush1.bf16.msra.mxu0 %v1021
    %1048 = vmatprep.subr.bf16.mxu0 0
    %1049 = vmatpush1.bf16.msra.mxu0 %v1020
    %1050 = vmatprep.subr.bf16.mxu0 0
    %1051 = vmatpush1.bf16.msra.mxu0 %v1019
    %1052 = vmatprep.subr.bf16.mxu0 0
    %1053 = vmatpush1.bf16.msra.mxu0 %v1018
    %1054 = vmatprep.subr.bf16.mxu0 0
    %1055 = vmatpush2.bf16.msra.mxu0 %v1033
    %1056 = vmatprep.subr.bf16.mxu0 0
    %1057 = vmatpush2.bf16.msra.mxu0 %v1032
    %1058 = vmatprep.subr.bf16.mxu0 0
    %1059 = vmatpush2.bf16.msra.mxu0 %v1031
    %1060 = vmatprep.subr.bf16.mxu0 0
    %1061 = vmatpush2.bf16.msra.mxu0 %v1030
    %1062 = vmatprep.subr.bf16.mxu0 0
    %1063 = vmatpush2.bf16.msra.mxu0 %v1029
    %1064 = vmatprep.subr.bf16.mxu0 0
    %1065 = vmatpush2.bf16.msra.mxu0 %v1028
    %1066 = vmatprep.subr.bf16.mxu0 0
    %1067 = vmatpush2.bf16.msra.mxu0 %v1027
    %1068 = vmatprep.subr.bf16.mxu0 0
    %1069 = vmatpush2.bf16.msra.mxu0 %v1026
    %1070 = vmatprep.mubr.bf16.mxu0 %v537
    %1071 = vmatmul.mubr.bf16.gmra.mxu0 %v536
    %v1072 = vpop.f32.mrf.mxu0
    %v1073 = vadd.f32 %v1037, %v1072
    %v1074 = vpop.f32.mrf.mxu0
    %v1075 = vpop.f32.mrf.mxu0
    %v1076 = vadd.f32 %v1037, %v1075
    %v1077 = vpop.f32.mrf.mxu0
    %1078 = vmatprep.mubr.bf16.mxu0 %v539
    %1079 = vmatmul.mubr.bf16.gmra.mxu0 %v538
    %v1080 = vpop.f32.mrf.mxu0
    %v1081 = vadd.f32 %v1037, %v1080
    %v1082 = vpop.f32.mrf.mxu0
    %v1083 = vpop.f32.mrf.mxu0
    %v1084 = vadd.f32 %v1037, %v1083
    %v1085 = vpop.f32.mrf.mxu0
    %1086 = vmatprep.mubr.bf16.mxu0 %v541
    %1087 = vmatmul.mubr.bf16.gmra.mxu0 %v540
    %v1088 = vpop.f32.mrf.mxu0
    %v1089 = vadd.f32 %v1037, %v1088
    %v1090 = vpop.f32.mrf.mxu0
    %v1091 = vpop.f32.mrf.mxu0
    %v1092 = vadd.f32 %v1037, %v1091
    %v1093 = vpop.f32.mrf.mxu0
    %1094 = vmatprep.mubr.bf16.mxu0 %v543
    %1095 = vmatmul.mubr.bf16.gmra.mxu0 %v542
    %v1096 = vpop.f32.mrf.mxu0
    %v1097 = vadd.f32 %v1037, %v1096
    %v1098 = vpop.f32.mrf.mxu0
    %v1099 = vpop.f32.mrf.mxu0
    %v1100 = vadd.f32 %v1037, %v1099
    %v1101 = vpop.f32.mrf.mxu0
    %1102 = vmatprep.mubr.bf16.mxu0 %v545
    %1103 = vmatmul.mubr.bf16.gmra.mxu0 %v544
    %v1104 = vpop.f32.mrf.mxu0
    %v1105 = vadd.f32 %v1037, %v1104
    %v1106 = vpop.f32.mrf.mxu0
    %v1107 = vpop.f32.mrf.mxu0
    %v1108 = vadd.f32 %v1037, %v1107
    %v1109 = vpop.f32.mrf.mxu0
    %1110 = vmatprep.mubr.bf16.mxu0 %v547
    %1111 = vmatmul.mubr.bf16.gmra.mxu0 %v546
    %v1112 = vpop.f32.mrf.mxu0
    %v1113 = vadd.f32 %v1037, %v1112
    %v1114 = vpop.f32.mrf.mxu0
    %v1115 = vpop.f32.mrf.mxu0
    %v1116 = vadd.f32 %v1037, %v1115
    %v1117 = vpop.f32.mrf.mxu0
    %1118 = vmatprep.mubr.bf16.mxu0 %v549
    %1119 = vmatmul.mubr.bf16.gmra.mxu0 %v548
    %v1120 = vpop.f32.mrf.mxu0
    %v1121 = vadd.f32 %v1037, %v1120
    %v1122 = vpop.f32.mrf.mxu0
    %v1123 = vpop.f32.mrf.mxu0
    %v1124 = vadd.f32 %v1037, %v1123
    %v1125 = vpop.f32.mrf.mxu0
    %1126 = vmatprep.mubr.bf16.mxu0 %v551
    %1127 = vmatmul.mubr.bf16.gmra.mxu0 %v550
    %v1128 = vpop.f32.mrf.mxu0
    %v1129 = vadd.f32 %v1037, %v1128
    %v1130 = vpop.f32.mrf.mxu0
    %v1131 = vpop.f32.mrf.mxu0
    %v1132 = vadd.f32 %v1037, %v1131
    %v1133 = vpop.f32.mrf.mxu0
    %1134 = vmatprep.mubr.bf16.mxu0 %v553
    %1135 = vmatmul.mubr.bf16.gmra.mxu0 %v552
    %v1136 = vpop.f32.mrf.mxu0
    %v1137 = vadd.f32 %v1037, %v1136
    %v1138 = vpop.f32.mrf.mxu0
    %v1139 = vpop.f32.mrf.mxu0
    %v1140 = vadd.f32 %v1037, %v1139
    %v1141 = vpop.f32.mrf.mxu0
    %1142 = vmatprep.mubr.bf16.mxu0 %v555
    %1143 = vmatmul.mubr.bf16.gmra.mxu0 %v554
    %v1144 = vpop.f32.mrf.mxu0
    %v1145 = vadd.f32 %v1037, %v1144
    %v1146 = vpop.f32.mrf.mxu0
    %v1147 = vpop.f32.mrf.mxu0
    %v1148 = vadd.f32 %v1037, %v1147
    %v1149 = vpop.f32.mrf.mxu0
    %1150 = vmatprep.mubr.bf16.mxu0 %v557
    %1151 = vmatmul.mubr.bf16.gmra.mxu0 %v556
    %v1152 = vpop.f32.mrf.mxu0
    %v1153 = vadd.f32 %v1037, %v1152
    %v1154 = vpop.f32.mrf.mxu0
    %v1155 = vpop.f32.mrf.mxu0
    %v1156 = vadd.f32 %v1037, %v1155
    %v1157 = vpop.f32.mrf.mxu0
    %1158 = vmatprep.mubr.bf16.mxu0 %v559
    %1159 = vmatmul.mubr.bf16.gmra.mxu0 %v558
    %v1160 = vpop.f32.mrf.mxu0
    %v1161 = vadd.f32 %v1037, %v1160
    %v1162 = vpop.f32.mrf.mxu0
    %v1163 = vpop.f32.mrf.mxu0
    %v1164 = vadd.f32 %v1037, %v1163
    %v1165 = vpop.f32.mrf.mxu0
    %1166 = vmatprep.mubr.bf16.mxu0 %v561
    %1167 = vmatmul.mubr.bf16.gmra.mxu0 %v560
    %v1168 = vpop.f32.mrf.mxu0
    %v1169 = vadd.f32 %v1037, %v1168
    %v1170 = vpop.f32.mrf.mxu0
    %v1171 = vpop.f32.mrf.mxu0
    %v1172 = vadd.f32 %v1037, %v1171
    %v1173 = vpop.f32.mrf.mxu0
    %1174 = vmatprep.mubr.bf16.mxu0 %v563
    %1175 = vmatmul.mubr.bf16.gmra.mxu0 %v562
    %v1176 = vpop.f32.mrf.mxu0
    %v1177 = vadd.f32 %v1037, %v1176
    %v1178 = vpop.f32.mrf.mxu0
    %v1179 = vpop.f32.mrf.mxu0
    %v1180 = vadd.f32 %v1037, %v1179
    %v1181 = vpop.f32.mrf.mxu0
    %1182 = vmatprep.mubr.bf16.mxu0 %v565
    %1183 = vmatmul.mubr.bf16.gmra.mxu0 %v564
    %v1184 = vpop.f32.mrf.mxu0
    %v1185 = vadd.f32 %v1037, %v1184
    %v1186 = vpop.f32.mrf.mxu0
    %v1187 = vpop.f32.mrf.mxu0
    %v1188 = vadd.f32 %v1037, %v1187
    %v1189 = vpop.f32.mrf.mxu0
    %1190 = vmatprep.mubr.bf16.mxu0 %v567
    %1191 = vmatmul.mubr.bf16.gmra.mxu0 %v566
    %v1192 = vpop.f32.mrf.mxu0
    %v1193 = vadd.f32 %v1037, %v1192
    %v1194 = vpop.f32.mrf.mxu0
    %v1195 = vpop.f32.mrf.mxu0
    %v1196 = vadd.f32 %v1037, %v1195
    %v1197 = vpop.f32.mrf.mxu0
    %1198 = vdwg.mxu0
    %1199 = vmax.xlane.f32.xlu0 %v1073
    %v1200 = vpop.xlane.xlu0 %1199
    %1201 = vmax.xlane.f32.xlu0 %v1076
    %v1202 = vpop.xlane.xlu0 %1201
    %1203 = vmax.xlane.f32.xlu0 %v1081
    %v1204 = vpop.xlane.xlu0 %1203
    %1205 = vmax.xlane.f32.xlu0 %v1084
    %v1206 = vpop.xlane.xlu0 %1205
    %1207 = vmax.xlane.f32.xlu0 %v1089
    %v1208 = vpop.xlane.xlu0 %1207
    %1209 = vmax.xlane.f32.xlu0 %v1092
    %v1210 = vpop.xlane.xlu0 %1209
    %1211 = vmax.xlane.f32.xlu0 %v1097
    %v1212 = vpop.xlane.xlu0 %1211
    %1213 = vmax.xlane.f32.xlu0 %v1100
    %v1214 = vpop.xlane.xlu0 %1213
    %1215 = vmax.xlane.f32.xlu0 %v1105
    %v1216 = vpop.xlane.xlu0 %1215
    %1217 = vmax.xlane.f32.xlu0 %v1108
    %v1218 = vpop.xlane.xlu0 %1217
    %1219 = vmax.xlane.f32.xlu0 %v1113
    %v1220 = vpop.xlane.xlu0 %1219
    %1221 = vmax.xlane.f32.xlu0 %v1116
    %v1222 = vpop.xlane.xlu0 %1221
    %1223 = vmax.xlane.f32.xlu0 %v1121
    %v1224 = vpop.xlane.xlu0 %1223
    %1225 = vmax.xlane.f32.xlu0 %v1124
    %v1226 = vpop.xlane.xlu0 %1225
    %1227 = vmax.xlane.f32.xlu0 %v1129
    %v1228 = vpop.xlane.xlu0 %1227
    %1229 = vmax.xlane.f32.xlu0 %v1132
    %v1230 = vpop.xlane.xlu0 %1229
    %1231 = vmax.xlane.f32.xlu0 %v1137
    %v1232 = vpop.xlane.xlu0 %1231
    %1233 = vmax.xlane.f32.xlu0 %v1140
    %v1234 = vpop.xlane.xlu0 %1233
    %1235 = vmax.xlane.f32.xlu0 %v1145
    %v1236 = vpop.xlane.xlu0 %1235
    %1237 = vmax.xlane.f32.xlu0 %v1148
    %v1238 = vpop.xlane.xlu0 %1237
    %1239 = vmax.xlane.f32.xlu0 %v1153
    %v1240 = vpop.xlane.xlu0 %1239
    %1241 = vmax.xlane.f32.xlu0 %v1156
    %v1242 = vpop.xlane.xlu0 %1241
    %1243 = vmax.xlane.f32.xlu0 %v1161
    %v1244 = vpop.xlane.xlu0 %1243
    %1245 = vmax.xlane.f32.xlu0 %v1164
    %v1246 = vpop.xlane.xlu0 %1245
    %1247 = vmax.xlane.f32.xlu0 %v1169
    %v1248 = vpop.xlane.xlu0 %1247
    %1249 = vmax.xlane.f32.xlu0 %v1172
    %v1250 = vpop.xlane.xlu0 %1249
    %1251 = vmax.xlane.f32.xlu0 %v1177
    %v1252 = vpop.xlane.xlu0 %1251
    %1253 = vmax.xlane.f32.xlu0 %v1180
    %v1254 = vpop.xlane.xlu0 %1253
    %1255 = vmax.xlane.f32.xlu0 %v1185
    %v1256 = vpop.xlane.xlu0 %1255
    %1257 = vmax.xlane.f32.xlu0 %v1188
    %v1258 = vpop.xlane.xlu0 %1257
    %1259 = vmax.xlane.f32.xlu0 %v1193
    %v1260 = vpop.xlane.xlu0 %1259
    %1261 = vmax.xlane.f32.xlu0 %v1196
    %v1262 = vpop.xlane.xlu0 %1261
    %v1263 = vsub.f32 %v1073, %v1200
    %v1264 = vsub.f32 %v1076, %v1202
    %v1265 = vsub.f32 %v1081, %v1204
    %v1266 = vsub.f32 %v1084, %v1206
    %v1267 = vsub.f32 %v1089, %v1208
    %v1268 = vsub.f32 %v1092, %v1210
    %v1269 = vsub.f32 %v1097, %v1212
    %v1270 = vsub.f32 %v1100, %v1214
    %v1271 = vsub.f32 %v1105, %v1216
    %v1272 = vsub.f32 %v1108, %v1218
    %v1273 = vsub.f32 %v1113, %v1220
    %v1274 = vsub.f32 %v1116, %v1222
    %v1275 = vsub.f32 %v1121, %v1224
    %v1276 = vsub.f32 %v1124, %v1226
    %v1277 = vsub.f32 %v1129, %v1228
    %v1278 = vsub.f32 %v1132, %v1230
    %v1279 = vsub.f32 %v1137, %v1232
    %v1280 = vsub.f32 %v1140, %v1234
    %v1281 = vsub.f32 %v1145, %v1236
    %v1282 = vsub.f32 %v1148, %v1238
    %v1283 = vsub.f32 %v1153, %v1240
    %v1284 = vsub.f32 %v1156, %v1242
    %v1285 = vsub.f32 %v1161, %v1244
    %v1286 = vsub.f32 %v1164, %v1246
    %v1287 = vsub.f32 %v1169, %v1248
    %v1288 = vsub.f32 %v1172, %v1250
    %v1289 = vsub.f32 %v1177, %v1252
    %v1290 = vsub.f32 %v1180, %v1254
    %v1291 = vsub.f32 %v1185, %v1256
    %v1292 = vsub.f32 %v1188, %v1258
    %v1293 = vsub.f32 %v1193, %v1260
    %v1294 = vsub.f32 %v1196, %v1262
    %v1295 = vmul.f32 %v1263, 1.442695
    %v1296 = vpow.pop %v1295
    %v1297 = vmul.f32 %v1264, 1.442695
    %v1298 = vpow.pop %v1297
    %v1299 = vmul.f32 %v1265, 1.442695
    %v1300 = vpow.pop %v1299
    %v1301 = vmul.f32 %v1266, 1.442695
    %v1302 = vpow.pop %v1301
    %v1303 = vmul.f32 %v1267, 1.442695
    %v1304 = vpow.pop %v1303
    %v1305 = vmul.f32 %v1268, 1.442695
    %v1306 = vpow.pop %v1305
    %v1307 = vmul.f32 %v1269, 1.442695
    %v1308 = vpow.pop %v1307
    %v1309 = vmul.f32 %v1270, 1.442695
    %v1310 = vpow.pop %v1309
    %v1311 = vmul.f32 %v1271, 1.442695
    %v1312 = vpow.pop %v1311
    %v1313 = vmul.f32 %v1272, 1.442695
    %v1314 = vpow.pop %v1313
    %v1315 = vmul.f32 %v1273, 1.442695
    %v1316 = vpow.pop %v1315
    %v1317 = vmul.f32 %v1274, 1.442695
    %v1318 = vpow.pop %v1317
    %v1319 = vmul.f32 %v1275, 1.442695
    %v1320 = vpow.pop %v1319
    %v1321 = vmul.f32 %v1276, 1.442695
    %v1322 = vpow.pop %v1321
    %v1323 = vmul.f32 %v1277, 1.442695
    %v1324 = vpow.pop %v1323
    %v1325 = vmul.f32 %v1278, 1.442695
    %v1326 = vpow.pop %v1325
    %v1327 = vmul.f32 %v1279, 1.442695
    %v1328 = vpow.pop %v1327
    %v1329 = vmul.f32 %v1280, 1.442695
    %v1330 = vpow.pop %v1329
    %v1331 = vmul.f32 %v1281, 1.442695
    %v1332 = vpow.pop %v1331
    %v1333 = vmul.f32 %v1282, 1.442695
    %v1334 = vpow.pop %v1333
    %v1335 = vmul.f32 %v1283, 1.442695
    %v1336 = vpow.pop %v1335
    %v1337 = vmul.f32 %v1284, 1.442695
    %v1338 = vpow.pop %v1337
    %v1339 = vmul.f32 %v1285, 1.442695
    %v1340 = vpow.pop %v1339
    %v1341 = vmul.f32 %v1286, 1.442695
    %v1342 = vpow.pop %v1341
    %v1343 = vmul.f32 %v1287, 1.442695
    %v1344 = vpow.pop %v1343
    %v1345 = vmul.f32 %v1288, 1.442695
    %v1346 = vpow.pop %v1345
    %v1347 = vmul.f32 %v1289, 1.442695
    %v1348 = vpow.pop %v1347
    %v1349 = vmul.f32 %v1290, 1.442695
    %v1350 = vpow.pop %v1349
    %v1351 = vmul.f32 %v1291, 1.442695
    %v1352 = vpow.pop %v1351
    %v1353 = vmul.f32 %v1292, 1.442695
    %v1354 = vpow.pop %v1353
    %v1355 = vmul.f32 %v1293, 1.442695
    %v1356 = vpow.pop %v1355
    %v1357 = vmul.f32 %v1294, 1.442695
    %v1358 = vpow.pop %v1357
    %1359 = vadd.xlane.f32.xlu0 %v1296
    %v1360 = vpop.xlane.xlu0 %1359
    %1361 = vadd.xlane.f32.xlu0 %v1298
    %v1362 = vpop.xlane.xlu0 %1361
    %1363 = vadd.xlane.f32.xlu0 %v1300
    %v1364 = vpop.xlane.xlu0 %1363
    %1365 = vadd.xlane.f32.xlu0 %v1302
    %v1366 = vpop.xlane.xlu0 %1365
    %1367 = vadd.xlane.f32.xlu0 %v1304
    %v1368 = vpop.xlane.xlu0 %1367
    %1369 = vadd.xlane.f32.xlu0 %v1306
    %v1370 = vpop.xlane.xlu0 %1369
    %1371 = vadd.xlane.f32.xlu0 %v1308
    %v1372 = vpop.xlane.xlu0 %1371
    %1373 = vadd.xlane.f32.xlu0 %v1310
    %v1374 = vpop.xlane.xlu0 %1373
    %1375 = vadd.xlane.f32.xlu0 %v1312
    %v1376 = vpop.xlane.xlu0 %1375
    %1377 = vadd.xlane.f32.xlu0 %v1314
    %v1378 = vpop.xlane.xlu0 %1377
    %1379 = vadd.xlane.f32.xlu0 %v1316
    %v1380 = vpop.xlane.xlu0 %1379
    %1381 = vadd.xlane.f32.xlu0 %v1318
    %v1382 = vpop.xlane.xlu0 %1381
    %1383 = vadd.xlane.f32.xlu0 %v1320
    %v1384 = vpop.xlane.xlu0 %1383
    %1385 = vadd.xlane.f32.xlu0 %v1322
    %v1386 = vpop.xlane.xlu0 %1385
    %1387 = vadd.xlane.f32.xlu0 %v1324
    %v1388 = vpop.xlane.xlu0 %1387
    %1389 = vadd.xlane.f32.xlu0 %v1326
    %v1390 = vpop.xlane.xlu0 %1389
    %1391 = vadd.xlane.f32.xlu0 %v1328
    %v1392 = vpop.xlane.xlu0 %1391
    %1393 = vadd.xlane.f32.xlu0 %v1330
    %v1394 = vpop.xlane.xlu0 %1393
    %1395 = vadd.xlane.f32.xlu0 %v1332
    %v1396 = vpop.xlane.xlu0 %1395
    %1397 = vadd.xlane.f32.xlu0 %v1334
    %v1398 = vpop.xlane.xlu0 %1397
    %1399 = vadd.xlane.f32.xlu0 %v1336
    %v1400 = vpop.xlane.xlu0 %1399
    %1401 = vadd.xlane.f32.xlu0 %v1338
    %v1402 = vpop.xlane.xlu0 %1401
    %1403 = vadd.xlane.f32.xlu0 %v1340
    %v1404 = vpop.xlane.xlu0 %1403
    %1405 = vadd.xlane.f32.xlu0 %v1342
    %v1406 = vpop.xlane.xlu0 %1405
    %1407 = vadd.xlane.f32.xlu0 %v1344
    %v1408 = vpop.xlane.xlu0 %1407
    %1409 = vadd.xlane.f32.xlu0 %v1346
    %v1410 = vpop.xlane.xlu0 %1409
    %1411 = vadd.xlane.f32.xlu0 %v1348
    %v1412 = vpop.xlane.xlu0 %1411
    %1413 = vadd.xlane.f32.xlu0 %v1350
    %v1414 = vpop.xlane.xlu0 %1413
    %1415 = vadd.xlane.f32.xlu0 %v1352
    %v1416 = vpop.xlane.xlu0 %1415
    %1417 = vadd.xlane.f32.xlu0 %v1354
    %v1418 = vpop.xlane.xlu0 %1417
    %1419 = vadd.xlane.f32.xlu0 %v1356
    %v1420 = vpop.xlane.xlu0 %1419
    %1421 = vadd.xlane.f32.xlu0 %v1358
    %v1422 = vpop.xlane.xlu0 %1421
    %v1423 = vlog2.pop %v1360
    %v1424 = vmul.f32 %v1423, 0.6931472
    %v1425 = vlog2.pop %v1362
    %v1426 = vmul.f32 %v1425, 0.6931472
    %v1427 = vlog2.pop %v1364
    %v1428 = vmul.f32 %v1427, 0.6931472
    %v1429 = vlog2.pop %v1366
    %v1430 = vmul.f32 %v1429, 0.6931472
    %v1431 = vlog2.pop %v1368
    %v1432 = vmul.f32 %v1431, 0.6931472
    %v1433 = vlog2.pop %v1370
    %v1434 = vmul.f32 %v1433, 0.6931472
    %v1435 = vlog2.pop %v1372
    %v1436 = vmul.f32 %v1435, 0.6931472
    %v1437 = vlog2.pop %v1374
    %v1438 = vmul.f32 %v1437, 0.6931472
    %v1439 = vlog2.pop %v1376
    %v1440 = vmul.f32 %v1439, 0.6931472
    %v1441 = vlog2.pop %v1378
    %v1442 = vmul.f32 %v1441, 0.6931472
    %v1443 = vlog2.pop %v1380
    %v1444 = vmul.f32 %v1443, 0.6931472
    %v1445 = vlog2.pop %v1382
    %v1446 = vmul.f32 %v1445, 0.6931472
    %v1447 = vlog2.pop %v1384
    %v1448 = vmul.f32 %v1447, 0.6931472
    %v1449 = vlog2.pop %v1386
    %v1450 = vmul.f32 %v1449, 0.6931472
    %v1451 = vlog2.pop %v1388
    %v1452 = vmul.f32 %v1451, 0.6931472
    %v1453 = vlog2.pop %v1390
    %v1454 = vmul.f32 %v1453, 0.6931472
    %v1455 = vlog2.pop %v1392
    %v1456 = vmul.f32 %v1455, 0.6931472
    %v1457 = vlog2.pop %v1394
    %v1458 = vmul.f32 %v1457, 0.6931472
    %v1459 = vlog2.pop %v1396
    %v1460 = vmul.f32 %v1459, 0.6931472
    %v1461 = vlog2.pop %v1398
    %v1462 = vmul.f32 %v1461, 0.6931472
    %v1463 = vlog2.pop %v1400
    %v1464 = vmul.f32 %v1463, 0.6931472
    %v1465 = vlog2.pop %v1402
    %v1466 = vmul.f32 %v1465, 0.6931472
    %v1467 = vlog2.pop %v1404
    %v1468 = vmul.f32 %v1467, 0.6931472
    %v1469 = vlog2.pop %v1406
    %v1470 = vmul.f32 %v1469, 0.6931472
    %v1471 = vlog2.pop %v1408
    %v1472 = vmul.f32 %v1471, 0.6931472
    %v1473 = vlog2.pop %v1410
    %v1474 = vmul.f32 %v1473, 0.6931472
    %v1475 = vlog2.pop %v1412
    %v1476 = vmul.f32 %v1475, 0.6931472
    %v1477 = vlog2.pop %v1414
    %v1478 = vmul.f32 %v1477, 0.6931472
    %v1479 = vlog2.pop %v1416
    %v1480 = vmul.f32 %v1479, 0.6931472
    %v1481 = vlog2.pop %v1418
    %v1482 = vmul.f32 %v1481, 0.6931472
    %v1483 = vlog2.pop %v1420
    %v1484 = vmul.f32 %v1483, 0.6931472
    %v1485 = vlog2.pop %v1422
    %v1486 = vmul.f32 %v1485, 0.6931472
    %v1487 = vsub.f32 %v1263, %v1424
    %v1488 = vsub.f32 %v1264, %v1426
    %v1489 = vsub.f32 %v1265, %v1428
    %v1490 = vsub.f32 %v1266, %v1430
    %v1491 = vsub.f32 %v1267, %v1432
    %v1492 = vsub.f32 %v1268, %v1434
    %v1493 = vsub.f32 %v1269, %v1436
    %v1494 = vsub.f32 %v1270, %v1438
    %v1495 = vsub.f32 %v1271, %v1440
    %v1496 = vsub.f32 %v1272, %v1442
    %v1497 = vsub.f32 %v1273, %v1444
    %v1498 = vsub.f32 %v1274, %v1446
    %v1499 = vsub.f32 %v1275, %v1448
    %v1500 = vsub.f32 %v1276, %v1450
    %v1501 = vsub.f32 %v1277, %v1452
    %v1502 = vsub.f32 %v1278, %v1454
    %v1503 = vsub.f32 %v1279, %v1456
    %v1504 = vsub.f32 %v1280, %v1458
    %v1505 = vsub.f32 %v1281, %v1460
    %v1506 = vsub.f32 %v1282, %v1462
    %v1507 = vsub.f32 %v1283, %v1464
    %v1508 = vsub.f32 %v1284, %v1466
    %v1509 = vsub.f32 %v1285, %v1468
    %v1510 = vsub.f32 %v1286, %v1470
    %v1511 = vsub.f32 %v1287, %v1472
    %v1512 = vsub.f32 %v1288, %v1474
    %v1513 = vsub.f32 %v1289, %v1476
    %v1514 = vsub.f32 %v1290, %v1478
    %v1515 = vsub.f32 %v1291, %v1480
    %v1516 = vsub.f32 %v1292, %v1482
    %v1517 = vsub.f32 %v1293, %v1484
    %v1518 = vsub.f32 %v1294, %v1486
    %1519 = vst [vmem:[%s4] sm:$0xff] %v1487
    %1520 = vst [vmem:[%s4 + $0x8] sm:$0xff] %v1488
    %1521 = vst [vmem:[%s4 + $0x10] sm:$0xff] %v1489
    %1522 = vst [vmem:[%s4 + $0x18] sm:$0xff] %v1490
    %1523 = vst [vmem:[%s4 + $0x20] sm:$0xff] %v1491
    %1524 = vst [vmem:[%s4 + $0x28] sm:$0xff] %v1492
    %1525 = vst [vmem:[%s4 + $0x30] sm:$0xff] %v1493
    %1526 = vst [vmem:[%s4 + $0x38] sm:$0xff] %v1494
    %1527 = vst [vmem:[%s4 + $0x40] sm:$0xff] %v1495
    %1528 = vst [vmem:[%s4 + $0x48] sm:$0xff] %v1496
    %1529 = vst [vmem:[%s4 + $0x50] sm:$0xff] %v1497
    %1530 = vst [vmem:[%s4 + $0x58] sm:$0xff] %v1498
    %1531 = vst [vmem:[%s4 + $0x60] sm:$0xff] %v1499
    %1532 = vst [vmem:[%s4 + $0x68] sm:$0xff] %v1500
    %1533 = vst [vmem:[%s4 + $0x70] sm:$0xff] %v1501
    %1534 = vst [vmem:[%s4 + $0x78] sm:$0xff] %v1502
    %1535 = vst [vmem:[%s4 + $0x80] sm:$0xff] %v1503
    %1536 = vst [vmem:[%s4 + $0x88] sm:$0xff] %v1504
    %1537 = vst [vmem:[%s4 + $0x90] sm:$0xff] %v1505
    %1538 = vst [vmem:[%s4 + $0x98] sm:$0xff] %v1506
    %1539 = vst [vmem:[%s4 + $0xa0] sm:$0xff] %v1507
    %1540 = vst [vmem:[%s4 + $0xa8] sm:$0xff] %v1508
    %1541 = vst [vmem:[%s4 + $0xb0] sm:$0xff] %v1509
    %1542 = vst [vmem:[%s4 + $0xb8] sm:$0xff] %v1510
    %1543 = vst [vmem:[%s4 + $0xc0] sm:$0xff] %v1511
    %1544 = vst [vmem:[%s4 + $0xc8] sm:$0xff] %v1512
    %1545 = vst [vmem:[%s4 + $0xd0] sm:$0xff] %v1513
    %1546 = vst [vmem:[%s4 + $0xd8] sm:$0xff] %v1514
    %1547 = vst [vmem:[%s4 + $0xe0] sm:$0xff] %v1515
    %1548 = vst [vmem:[%s4 + $0xe8] sm:$0xff] %v1516
    %1549 = vst [vmem:[%s4 + $0xf0] sm:$0xff] %v1517
    %1550 = vst [vmem:[%s4 + $0xf8] sm:$0xff] %v1518
    // Predicated region
    $region22: #{gcn_forward.1} parent=1 // pred_check
      _
    $region23: #{gcn_forward.1} parent=1 // pred_check_branch
      %1552 = sbr.rel (0) target = $region25
    $region24: #{gcn_forward.1} parent=1 // pred_region
      _
    $region25: #{gcn_forward.1} parent=1 // pred_fallthru
      _
    // Predicated region
    $region26: #{gcn_forward.1} parent=1 // pred_check
      _
    $region27: #{gcn_forward.1} parent=1 // pred_check_branch
      %1554 = sbr.rel (0) target = $region29
    $region28: #{gcn_forward.1} parent=1 // pred_region
      _
    $region29: #{gcn_forward.1} parent=1 // pred_fallthru
      _
    %1555 = vsyncpa [#allocation3], 1

</llo_original>
